<compile_context>
chip_gen: v6e
topology: v6e:2x2x1
jax: 0.10.0
libtpu: 0.0.40
codegen_flags: <defaults>
</compile_context>

<pallas_src>
import functools

import jax
import jax.numpy as jnp
from jax import lax
from jax.experimental import pallas as pl


CONFIG = dict(
    vocab_size=128,
    max_position=16,
    type_vocab=2,
    embedding_size=16,   # ALBERT factorized embedding dim (E < H)
    hidden=32,
    num_heads=2,
    intermediate=64,
    num_layers=2,        # layers share one set of weights (ALBERT)
    num_labels=2,
    layer_norm_eps=1e-12,
)

LANE = 128  # lane-pad width for packed weight slabs (aligned in-kernel slices)


# ----------------------------- fused Pallas kernel ---------------------------

def _albert_fused_kernel(*refs, batch, seq, cfg, with_loss):
    if with_loss:
        tok_ref, we_ref, wrow_ref, wh_ref, vec_ref, logits_ref, loss_ref = refs
    else:
        tok_ref, we_ref, wrow_ref, wh_ref, vec_ref, logits_ref = refs
        loss_ref = None

    E = cfg["embedding_size"]
    H = cfg["hidden"]
    I = cfg["intermediate"]
    C = cfg["num_labels"]
    V = cfg["vocab_size"]
    nH = cfg["num_heads"]
    nL = cfg["num_layers"]
    eps = cfg["layer_norm_eps"]
    dh = H // nH
    R = batch * seq

    f32, bf16 = jnp.float32, jnp.bfloat16

    def vec(row, width):
        # one bias/LN vector packed as a lane-dense row of the (12,128) slab
        return vec_ref[pl.ds(row, 1), pl.ds(0, width)]          # (1, width) f32

    def layer_norm(x, g, b):
        mu = jnp.mean(x, axis=-1, keepdims=True)
        xc = x - mu
        var = jnp.mean(xc * xc, axis=-1, keepdims=True)
        return xc * lax.rsqrt(var + eps) * g + b

    def gelu_new(x):
        # ALBERT hidden_act == "gelu_new" (tanh approximation)
        return 0.5 * x * (1.0 + jnp.tanh(0.7978845608028654 * (x + 0.044715 * x * x * x)))

    # ---- packed weights: static, aligned slices, loaded once ----------------
    word = we_ref[pl.ds(0, V), :]                               # (V, E)  bf16
    post = we_ref[pl.ds(V, seq), :].astype(f32)                 # (S, E)  pos + type0
    proj_w = wrow_ref[pl.ds(0, E), :]                           # (E, H)  bf16
    wffo = wrow_ref[pl.ds(E, I), :]                             # (I, H)  bf16
    wqkv = wh_ref[:, pl.ds(0 * LANE, 3 * H)]                    # (H, 3H) bf16 (Q pre-scaled)
    wff = wh_ref[:, pl.ds(1 * LANE, I)]                         # (H, I)  bf16
    wo = wh_ref[:, pl.ds(2 * LANE, H)]                          # (H, H)  bf16
    cls_w = wh_ref[:, pl.ds(3 * LANE, C)]                       # (H, C)  bf16

    eg, eb = vec(0, E), vec(1, E)
    proj_b = vec(2, H)
    bqkv = vec(3, 3 * H)
    bo = vec(4, H)
    l1g, l1b = vec(5, H), vec(6, H)
    bff = vec(7, I)
    bffo = vec(8, H)
    l2g, l2b = vec(9, H), vec(10, H)
    cls_b = vec(11, C)

    # ---- embeddings: in-kernel gather (one-hot matmul) + LN + E->H proj -----
    ids = tok_ref[pl.ds(0, R), pl.ds(0, 1)]                     # (R, 1) int32
    onehot = (ids == lax.broadcasted_iota(jnp.int32, (R, V), 1)).astype(bf16)
    xe = jnp.dot(onehot, word, preferred_element_type=f32)      # (R, E) word emb
    xe = xe + jnp.concatenate([post] * batch, axis=0)           # + pos + type0
    x = layer_norm(xe, eg, eb)
    h = jnp.dot(x.astype(bf16), proj_w, preferred_element_type=f32) + proj_b

    # ---- ALBERT encoder: ONE shared layer applied num_layers times ----------
    for _ in range(nL):
        # fused QKV projection, kept as a live value (no scratch round trip)
        qkv = jnp.dot(h.astype(bf16), wqkv, preferred_element_type=f32) + bqkv  # (R, 3H)

        ctx_rows = []
        for b in range(batch):
            blk = qkv[b * seq:(b + 1) * seq, :]                 # (S, 3H) value slice
            head_ctx = []
            for hd in range(nH):
                qh = blk[:, hd * dh:(hd + 1) * dh].astype(bf16)
                kh = blk[:, H + hd * dh:H + (hd + 1) * dh].astype(bf16)
                vh = blk[:, 2 * H + hd * dh:2 * H + (hd + 1) * dh].astype(bf16)
                # TODO(synk): attention_mask assumed all-ones (no padding positions).
                s = lax.dot_general(qh, kh, (((1,), (1,)), ((), ())),
                                    preferred_element_type=f32)  # (S, S); 1/sqrt(dh) folded in wqkv
                m = jnp.max(s, axis=-1, keepdims=True)
                p = jnp.exp(s - m)
                p = p * pl.reciprocal(jnp.sum(p, axis=-1, keepdims=True), approx=True)
                head_ctx.append(jnp.dot(p.astype(bf16), vh, preferred_element_type=f32))
            ctx_rows.append(jnp.concatenate(head_ctx, axis=-1))  # (S, H)
        ctx = jnp.concatenate(ctx_rows, axis=0)                  # (R, H) lane-dense value

        # output projection + residual LayerNorm
        attn = jnp.dot(ctx.astype(bf16), wo, preferred_element_type=f32) + bo
        h = layer_norm(attn + h, l1g, l1b)

        # FFN (gelu_new) + residual LayerNorm (intermediate never leaves vregs)
        f = gelu_new(jnp.dot(h.astype(bf16), wff, preferred_element_type=f32) + bff)
        f = jnp.dot(f.astype(bf16), wffo, preferred_element_type=f32) + bffo
        h = layer_norm(f + h, l2g, l2b)

    # ---- per-token classifier ------------------------------------------------
    logits = jnp.dot(h.astype(bf16), cls_w, preferred_element_type=f32) + cls_b  # (R, C)
    logits_ref[...] = logits

    if with_loss:
        # mean token-level cross entropy, true-class logit picked via iota compare
        labels = tok_ref[pl.ds(0, R), pl.ds(1, 1)]               # (R, 1) int32
        col = lax.broadcasted_iota(jnp.int32, (R, C), 1)
        true_logit = jnp.sum(jnp.where(col == labels, logits, 0.0),
                             axis=-1, keepdims=True)             # (R, 1)
        m = jnp.max(logits, axis=-1, keepdims=True)
        lse = jnp.log(jnp.sum(jnp.exp(logits - m), axis=-1, keepdims=True)) + m
        # TODO(synk): no ignore_index(-100) handling; all labels assumed valid.
        loss_ref[...] = jnp.broadcast_to(jnp.sum(lse - true_logit) / R, (1, 1))


# --------------------------- model definition --------------------------------

def init_params(key, cfg):
    E, H = cfg["embedding_size"], cfg["hidden"]
    I, C = cfg["intermediate"], cfg["num_labels"]
    keys = iter(jax.random.split(key, 32))

    def w(shape, std=0.02):
        return (std * jax.random.normal(next(keys), shape)).astype(jnp.float32)

    return {
        "embeddings": {
            "word": w((cfg["vocab_size"], E)),
            "pos": w((cfg["max_position"], E)),
            "type": w((cfg["type_vocab"], E)),
            "ln_g": jnp.ones((E,), jnp.float32),
            "ln_b": jnp.zeros((E,), jnp.float32),
        },
        "proj_w": w((E, H)),                       # embedding_hidden_mapping_in
        "proj_b": jnp.zeros((H,), jnp.float32),
        "layer": {                                 # single SHARED ALBERT layer
            "wqkv": w((H, 3 * H)), "bqkv": jnp.zeros((3 * H,), jnp.float32),
            "wo": w((H, H)), "bo": jnp.zeros((H,), jnp.float32),
            "ln1_g": jnp.ones((H,), jnp.float32), "ln1_b": jnp.zeros((H,), jnp.float32),
            "wff": w((H, I)), "bff": jnp.zeros((I,), jnp.float32),
            "wffo": w((I, H)), "bffo": jnp.zeros((H,), jnp.float32),
            "ln2_g": jnp.ones((H,), jnp.float32), "ln2_b": jnp.zeros((H,), jnp.float32),
        },
        "cls_w": w((H, C)),
        "cls_b": jnp.zeros((C,), jnp.float32),
    }


def pack_params(params, cfg, seq):
    """Pack all weights into 4 arrays (done ONCE, outside the per-call path)."""
    E, H = cfg["embedding_size"], cfg["hidden"]
    I = cfg["intermediate"]
    nH = cfg["num_heads"]
    dh = H // nH
    scale = 1.0 / float(dh) ** 0.5

    emb = params["embeddings"]
    lyr = params["layer"]

    # word table rows, then (position + token-type-0) rows  ->  (V+S, E) bf16
    # TODO(synk): token_type_ids assumed all-zero (type embedding row 0).
    post = emb["pos"][:seq] + emb["type"][0][None, :]
    we_pack = jnp.concatenate([emb["word"], post], axis=0).astype(jnp.bfloat16)

    # H-column matrices stacked on sublanes -> (E+I, H) bf16
    wrow_pack = jnp.concatenate([params["proj_w"], lyr["wffo"]], axis=0).astype(jnp.bfloat16)

    # H-row matrices, each lane-padded to 128 so in-kernel slices start lane-aligned
    def pad_lanes(m):
        return jnp.pad(m, ((0, 0), (0, LANE - m.shape[1])))

    wqkv = lyr["wqkv"].at[:, :H].multiply(scale)          # fold 1/sqrt(dh) into Q weights
    wh_pack = jnp.concatenate(
        [pad_lanes(wqkv), pad_lanes(lyr["wff"]),
         pad_lanes(lyr["wo"]), pad_lanes(params["cls_w"])],
        axis=1).astype(jnp.bfloat16)                      # (H, 4*128)

    # all bias / LayerNorm vectors: one (12, 128) f32 slab, one lane-dense row each
    def row(v):
        return jnp.pad(v.reshape(1, -1), ((0, 0), (0, LANE - v.shape[-1])))

    bqkv = lyr["bqkv"].at[:H].multiply(scale)             # fold scale into Q bias too
    vec_pack = jnp.concatenate([
        row(emb["ln_g"]), row(emb["ln_b"]), row(params["proj_b"]),
        row(bqkv), row(lyr["bo"]), row(lyr["ln1_g"]), row(lyr["ln1_b"]),
        row(lyr["bff"]), row(lyr["bffo"]), row(lyr["ln2_g"]), row(lyr["ln2_b"]),
        row(params["cls_b"])], axis=0).astype(jnp.float32)

    return dict(we=we_pack, wrow=wrow_pack, wh=wh_pack, vec=vec_pack)


def albert_token_forward(packed, input_ids, labels=None, *, cfg=CONFIG):
    """Mirrors forward_wrapper(AlbertForParallelTokenClassification, text, labels)."""
    B, S = input_ids.shape
    C = cfg["num_labels"]
    R = B * S
    with_loss = labels is not None

    ids = input_ids.reshape(R, 1).astype(jnp.int32)
    if with_loss:
        tok = jnp.concatenate([ids, labels.reshape(R, 1).astype(jnp.int32)], axis=1)
    else:
        tok = jnp.concatenate([ids, jnp.zeros((R, 1), jnp.int32)], axis=1)

    kernel = functools.partial(_albert_fused_kernel, batch=B, seq=S,
                               cfg=cfg, with_loss=with_loss)
    inputs = (tok, packed["we"], packed["wrow"], packed["wh"], packed["vec"])

    if not with_loss:
        logits2d = pl.pallas_call(
            kernel,
            out_shape=jax.ShapeDtypeStruct((R, C), jnp.float32),
        )(*inputs)
        return logits2d.reshape(B, S, C)

    logits2d, loss = pl.pallas_call(
        kernel,
        out_shape=(jax.ShapeDtypeStruct((R, C), jnp.float32),
                   jax.ShapeDtypeStruct((1, 1), jnp.float32)),
    )(*inputs)
    return loss[0, 0], logits2d.reshape(B, S, C)


# --------------------------------- main ---------------------------------------

if __name__ == "__main__":
    key = jax.random.PRNGKey(0)
    pkey, dkey, lkey = jax.random.split(key, 3)

    params = init_params(pkey, CONFIG)

    B, S = 2, 8
    packed = pack_params(params, CONFIG, S)

    input_ids = jax.random.randint(dkey, (B, S), 0, CONFIG["vocab_size"],
                                   dtype=jnp.int32)
    labels = jax.random.randint(lkey, (B, S), 0, CONFIG["num_labels"],
                                dtype=jnp.int32)

    # labels provided -> (loss, per-token logits)
    loss, logits = albert_token_forward(packed, input_ids, labels)
    # labels=None -> per-token logits only
    logits_only = albert_token_forward(packed, input_ids, None)

    jax.block_until_ready((loss, logits, logits_only))
    assert logits.shape == (B, S, CONFIG["num_labels"])
    assert logits_only.shape == (B, S, CONFIG["num_labels"])
    assert loss.shape == ()
    assert bool(jnp.isfinite(loss))
    print("KERNEL_OK")
</pallas_src>

<mosaic_0001>
module attributes {stable_mosaic.version = 11 : i64} {
  func.func @_albert_fused_kernel(%arg0: memref<16x2xi32, #tpu.memory_space<vmem>>, %arg1: memref<136x16xbf16, #tpu.memory_space<vmem>>, %arg2: memref<80x32xbf16, #tpu.memory_space<vmem>>, %arg3: memref<32x512xbf16, #tpu.memory_space<vmem>>, %arg4: memref<12x128xf32, #tpu.memory_space<vmem>>, %arg5: memref<16x2xf32, #tpu.memory_space<vmem>>, %arg6: memref<1x1xf32, #tpu.memory_space<vmem>>) attributes {dimension_semantics = [], scalar_prefetch = 0 : i64, scratch_operands = 0 : i64, tpu.core_type = #tpu.core_type<tc>} {
    %c0 = arith.constant 0 : index
    %c0_0 = arith.constant 0 : index
    %0 = vector.load %arg1[%c0, %c0_0] : memref<136x16xbf16, #tpu.memory_space<vmem>>, vector<128x16xbf16>
    %c128 = arith.constant 128 : index
    %c0_1 = arith.constant 0 : index
    %1 = vector.load %arg1[%c128, %c0_1] : memref<136x16xbf16, #tpu.memory_space<vmem>>, vector<8x16xbf16>
    %2 = arith.extf %1 : vector<8x16xbf16> to vector<8x16xf32>
    %c0_2 = arith.constant 0 : index
    %c0_3 = arith.constant 0 : index
    %3 = vector.load %arg2[%c0_2, %c0_3] : memref<80x32xbf16, #tpu.memory_space<vmem>>, vector<16x32xbf16>
    %c16 = arith.constant 16 : index
    %c0_4 = arith.constant 0 : index
    %4 = vector.load %arg2[%c16, %c0_4] : memref<80x32xbf16, #tpu.memory_space<vmem>>, vector<64x32xbf16>
    %c0_5 = arith.constant 0 : index
    %c0_6 = arith.constant 0 : index
    %5 = vector.load %arg3[%c0_5, %c0_6] : memref<32x512xbf16, #tpu.memory_space<vmem>>, vector<32x96xbf16>
    %c0_7 = arith.constant 0 : index
    %c128_8 = arith.constant 128 : index
    %6 = vector.load %arg3[%c0_7, %c128_8] : memref<32x512xbf16, #tpu.memory_space<vmem>>, vector<32x64xbf16>
    %c0_9 = arith.constant 0 : index
    %c256 = arith.constant 256 : index
    %7 = vector.load %arg3[%c0_9, %c256] : memref<32x512xbf16, #tpu.memory_space<vmem>>, vector<32x32xbf16>
    %c0_10 = arith.constant 0 : index
    %c384 = arith.constant 384 : index
    %8 = vector.load %arg3[%c0_10, %c384] : memref<32x512xbf16, #tpu.memory_space<vmem>>, vector<32x2xbf16>
    %c0_11 = arith.constant 0 : index
    %c0_12 = arith.constant 0 : index
    %9 = vector.load %arg4[%c0_11, %c0_12] : memref<12x128xf32, #tpu.memory_space<vmem>>, vector<1x16xf32>
    %c1 = arith.constant 1 : index
    %c0_13 = arith.constant 0 : index
    %10 = vector.load %arg4[%c1, %c0_13] : memref<12x128xf32, #tpu.memory_space<vmem>>, vector<1x16xf32>
    %c2 = arith.constant 2 : index
    %c0_14 = arith.constant 0 : index
    %11 = vector.load %arg4[%c2, %c0_14] : memref<12x128xf32, #tpu.memory_space<vmem>>, vector<1x32xf32>
    %c3 = arith.constant 3 : index
    %c0_15 = arith.constant 0 : index
    %12 = vector.load %arg4[%c3, %c0_15] : memref<12x128xf32, #tpu.memory_space<vmem>>, vector<1x96xf32>
    %c4 = arith.constant 4 : index
    %c0_16 = arith.constant 0 : index
    %13 = vector.load %arg4[%c4, %c0_16] : memref<12x128xf32, #tpu.memory_space<vmem>>, vector<1x32xf32>
    %c5 = arith.constant 5 : index
    %c0_17 = arith.constant 0 : index
    %14 = vector.load %arg4[%c5, %c0_17] : memref<12x128xf32, #tpu.memory_space<vmem>>, vector<1x32xf32>
    %c6 = arith.constant 6 : index
    %c0_18 = arith.constant 0 : index
    %15 = vector.load %arg4[%c6, %c0_18] : memref<12x128xf32, #tpu.memory_space<vmem>>, vector<1x32xf32>
    %c7 = arith.constant 7 : index
    %c0_19 = arith.constant 0 : index
    %16 = vector.load %arg4[%c7, %c0_19] : memref<12x128xf32, #tpu.memory_space<vmem>>, vector<1x64xf32>
    %c8 = arith.constant 8 : index
    %c0_20 = arith.constant 0 : index
    %17 = vector.load %arg4[%c8, %c0_20] : memref<12x128xf32, #tpu.memory_space<vmem>>, vector<1x32xf32>
    %c9 = arith.constant 9 : index
    %c0_21 = arith.constant 0 : index
    %18 = vector.load %arg4[%c9, %c0_21] : memref<12x128xf32, #tpu.memory_space<vmem>>, vector<1x32xf32>
    %c10 = arith.constant 10 : index
    %c0_22 = arith.constant 0 : index
    %19 = vector.load %arg4[%c10, %c0_22] : memref<12x128xf32, #tpu.memory_space<vmem>>, vector<1x32xf32>
    %c11 = arith.constant 11 : index
    %c0_23 = arith.constant 0 : index
    %20 = vector.load %arg4[%c11, %c0_23] : memref<12x128xf32, #tpu.memory_space<vmem>>, vector<1x2xf32>
    %c0_24 = arith.constant 0 : index
    %c0_25 = arith.constant 0 : index
    %21 = vector.load %arg0[%c0_24, %c0_25] : memref<16x2xi32, #tpu.memory_space<vmem>>, vector<16x1xi32>
    %22 = tpu.iota {dimensions = array<i32: 1>} : vector<16x128xi32>
    %23 = vector.broadcast %21 : vector<16x1xi32> to vector<16x128xi32>
    %24 = arith.cmpi eq, %23, %22 : vector<16x128xi32>
    %25 = arith.extui %24 : vector<16x128xi1> to vector<16x128xi32>
    %26 = arith.sitofp %25 : vector<16x128xi32> to vector<16x128xf32>
    %27 = arith.truncf %26 : vector<16x128xf32> to vector<16x128xbf16>
    %cst = arith.constant dense<0.000000e+00> : vector<16x16xf32>
    %28 = tpu.matmul %27, %0, %cst {dimension_numbers = #tpu.dot_dimension_numbers<[1], [0], [0], [1], [0, 0, 1, 1], [], []>} : vector<16x128xbf16>, vector<128x16xbf16>, vector<16x16xf32> -> vector<16x16xf32>
    %29 = tpu.concatenate %2, %2 in 0 : vector<8x16xf32>, vector<8x16xf32> -> vector<16x16xf32>
    %30 = arith.addf %28, %29 : vector<16x16xf32>
    %cst_26 = arith.constant dense<0.000000e+00> : vector<16xf32>
    %31 = vector.multi_reduction <add>, %30, %cst_26 [1] : vector<16x16xf32> to vector<16xf32>
    %32 = vector.shape_cast %31 : vector<16xf32> to vector<16x1xf32>
    %cst_27 = arith.constant 1.600000e+01 : f32
    %33 = vector.broadcast %cst_27 : f32 to vector<16x1xf32>
    %34 = arith.divf %32, %33 : vector<16x1xf32>
    %35 = vector.broadcast %34 : vector<16x1xf32> to vector<16x16xf32>
    %36 = arith.subf %30, %35 : vector<16x16xf32>
    %37 = arith.mulf %36, %36 : vector<16x16xf32>
    %cst_28 = arith.constant dense<0.000000e+00> : vector<16xf32>
    %38 = vector.multi_reduction <add>, %37, %cst_28 [1] : vector<16x16xf32> to vector<16xf32>
    %39 = vector.shape_cast %38 : vector<16xf32> to vector<16x1xf32>
    %cst_29 = arith.constant 1.600000e+01 : f32
    %40 = vector.broadcast %cst_29 : f32 to vector<16x1xf32>
    %41 = arith.divf %39, %40 : vector<16x1xf32>
    %cst_30 = arith.constant 9.99999996E-13 : f32
    %42 = vector.broadcast %cst_30 : f32 to vector<16x1xf32>
    %43 = arith.addf %41, %42 : vector<16x1xf32>
    %44 = math.rsqrt %43 : vector<16x1xf32>
    %45 = vector.broadcast %44 : vector<16x1xf32> to vector<16x16xf32>
    %46 = arith.mulf %36, %45 : vector<16x16xf32>
    %47 = vector.broadcast %9 : vector<1x16xf32> to vector<16x16xf32>
    %48 = arith.mulf %46, %47 : vector<16x16xf32>
    %49 = vector.broadcast %10 : vector<1x16xf32> to vector<16x16xf32>
    %50 = arith.addf %48, %49 : vector<16x16xf32>
    %51 = arith.truncf %50 : vector<16x16xf32> to vector<16x16xbf16>
    %cst_31 = arith.constant dense<0.000000e+00> : vector<16x32xf32>
    %52 = tpu.matmul %51, %3, %cst_31 {dimension_numbers = #tpu.dot_dimension_numbers<[1], [0], [0], [1], [0, 0, 1, 1], [], []>} : vector<16x16xbf16>, vector<16x32xbf16>, vector<16x32xf32> -> vector<16x32xf32>
    %53 = vector.broadcast %11 : vector<1x32xf32> to vector<16x32xf32>
    %54 = arith.addf %52, %53 : vector<16x32xf32>
    %55 = arith.truncf %54 : vector<16x32xf32> to vector<16x32xbf16>
    %cst_32 = arith.constant dense<0.000000e+00> : vector<16x96xf32>
    %56 = tpu.matmul %55, %5, %cst_32 {dimension_numbers = #tpu.dot_dimension_numbers<[1], [0], [0], [1], [0, 0, 1, 1], [], []>} : vector<16x32xbf16>, vector<32x96xbf16>, vector<16x96xf32> -> vector<16x96xf32>
    %57 = vector.broadcast %12 : vector<1x96xf32> to vector<16x96xf32>
    %58 = arith.addf %56, %57 : vector<16x96xf32>
    %59 = vector.extract_strided_slice %58 {offsets = [0, 0], sizes = [8, 96], strides = [1, 1]} : vector<16x96xf32> to vector<8x96xf32>
    %60 = vector.extract_strided_slice %59 {offsets = [0, 0], sizes = [8, 16], strides = [1, 1]} : vector<8x96xf32> to vector<8x16xf32>
    %61 = arith.truncf %60 : vector<8x16xf32> to vector<8x16xbf16>
    %62 = vector.extract_strided_slice %59 {offsets = [0, 32], sizes = [8, 16], strides = [1, 1]} : vector<8x96xf32> to vector<8x16xf32>
    %63 = arith.truncf %62 : vector<8x16xf32> to vector<8x16xbf16>
    %64 = vector.extract_strided_slice %59 {offsets = [0, 64], sizes = [8, 16], strides = [1, 1]} : vector<8x96xf32> to vector<8x16xf32>
    %65 = arith.truncf %64 : vector<8x16xf32> to vector<8x16xbf16>
    %cst_33 = arith.constant dense<0.000000e+00> : vector<8x8xf32>
    %66 = tpu.matmul %61, %63, %cst_33 {dimension_numbers = #tpu.dot_dimension_numbers<[1], [1], [0], [0], [0, 0, 1, 0], [], []>} : vector<8x16xbf16>, vector<8x16xbf16>, vector<8x8xf32> -> vector<8x8xf32>
    %cst_34 = arith.constant dense<0xFF800000> : vector<8xf32>
    %67 = vector.multi_reduction <maximumf>, %66, %cst_34 [1] : vector<8x8xf32> to vector<8xf32>
    %68 = vector.shape_cast %67 : vector<8xf32> to vector<8x1xf32>
    %69 = vector.broadcast %68 : vector<8x1xf32> to vector<8x8xf32>
    %70 = arith.subf %66, %69 : vector<8x8xf32>
    %71 = math.exp %70 : vector<8x8xf32>
    %cst_35 = arith.constant dense<0.000000e+00> : vector<8xf32>
    %72 = vector.multi_reduction <add>, %71, %cst_35 [1] : vector<8x8xf32> to vector<8xf32>
    %73 = vector.shape_cast %72 : vector<8xf32> to vector<8x1xf32>
    %74 = tpu.reciprocal %73 {approx = true} : vector<8x1xf32> -> vector<8x1xf32>
    %75 = vector.broadcast %74 : vector<8x1xf32> to vector<8x8xf32>
    %76 = arith.mulf %71, %75 : vector<8x8xf32>
    %77 = arith.truncf %76 : vector<8x8xf32> to vector<8x8xbf16>
    %cst_36 = arith.constant dense<0.000000e+00> : vector<8x16xf32>
    %78 = tpu.matmul %77, %65, %cst_36 {dimension_numbers = #tpu.dot_dimension_numbers<[1], [0], [0], [1], [0, 0, 1, 1], [], []>} : vector<8x8xbf16>, vector<8x16xbf16>, vector<8x16xf32> -> vector<8x16xf32>
    %79 = vector.extract_strided_slice %59 {offsets = [0, 16], sizes = [8, 16], strides = [1, 1]} : vector<8x96xf32> to vector<8x16xf32>
    %80 = arith.truncf %79 : vector<8x16xf32> to vector<8x16xbf16>
    %81 = vector.extract_strided_slice %59 {offsets = [0, 48], sizes = [8, 16], strides = [1, 1]} : vector<8x96xf32> to vector<8x16xf32>
    %82 = arith.truncf %81 : vector<8x16xf32> to vector<8x16xbf16>
    %83 = vector.extract_strided_slice %59 {offsets = [0, 80], sizes = [8, 16], strides = [1, 1]} : vector<8x96xf32> to vector<8x16xf32>
    %84 = arith.truncf %83 : vector<8x16xf32> to vector<8x16xbf16>
    %cst_37 = arith.constant dense<0.000000e+00> : vector<8x8xf32>
    %85 = tpu.matmul %80, %82, %cst_37 {dimension_numbers = #tpu.dot_dimension_numbers<[1], [1], [0], [0], [0, 0, 1, 0], [], []>} : vector<8x16xbf16>, vector<8x16xbf16>, vector<8x8xf32> -> vector<8x8xf32>
    %cst_38 = arith.constant dense<0xFF800000> : vector<8xf32>
    %86 = vector.multi_reduction <maximumf>, %85, %cst_38 [1] : vector<8x8xf32> to vector<8xf32>
    %87 = vector.shape_cast %86 : vector<8xf32> to vector<8x1xf32>
    %88 = vector.broadcast %87 : vector<8x1xf32> to vector<8x8xf32>
    %89 = arith.subf %85, %88 : vector<8x8xf32>
    %90 = math.exp %89 : vector<8x8xf32>
    %cst_39 = arith.constant dense<0.000000e+00> : vector<8xf32>
    %91 = vector.multi_reduction <add>, %90, %cst_39 [1] : vector<8x8xf32> to vector<8xf32>
    %92 = vector.shape_cast %91 : vector<8xf32> to vector<8x1xf32>
    %93 = tpu.reciprocal %92 {approx = true} : vector<8x1xf32> -> vector<8x1xf32>
    %94 = vector.broadcast %93 : vector<8x1xf32> to vector<8x8xf32>
    %95 = arith.mulf %90, %94 : vector<8x8xf32>
    %96 = arith.truncf %95 : vector<8x8xf32> to vector<8x8xbf16>
    %cst_40 = arith.constant dense<0.000000e+00> : vector<8x16xf32>
    %97 = tpu.matmul %96, %84, %cst_40 {dimension_numbers = #tpu.dot_dimension_numbers<[1], [0], [0], [1], [0, 0, 1, 1], [], []>} : vector<8x8xbf16>, vector<8x16xbf16>, vector<8x16xf32> -> vector<8x16xf32>
    %98 = tpu.concatenate %78, %97 in 1 : vector<8x16xf32>, vector<8x16xf32> -> vector<8x32xf32>
    %99 = vector.extract_strided_slice %58 {offsets = [8, 0], sizes = [8, 96], strides = [1, 1]} : vector<16x96xf32> to vector<8x96xf32>
    %100 = vector.extract_strided_slice %99 {offsets = [0, 0], sizes = [8, 16], strides = [1, 1]} : vector<8x96xf32> to vector<8x16xf32>
    %101 = arith.truncf %100 : vector<8x16xf32> to vector<8x16xbf16>
    %102 = vector.extract_strided_slice %99 {offsets = [0, 32], sizes = [8, 16], strides = [1, 1]} : vector<8x96xf32> to vector<8x16xf32>
    %103 = arith.truncf %102 : vector<8x16xf32> to vector<8x16xbf16>
    %104 = vector.extract_strided_slice %99 {offsets = [0, 64], sizes = [8, 16], strides = [1, 1]} : vector<8x96xf32> to vector<8x16xf32>
    %105 = arith.truncf %104 : vector<8x16xf32> to vector<8x16xbf16>
    %cst_41 = arith.constant dense<0.000000e+00> : vector<8x8xf32>
    %106 = tpu.matmul %101, %103, %cst_41 {dimension_numbers = #tpu.dot_dimension_numbers<[1], [1], [0], [0], [0, 0, 1, 0], [], []>} : vector<8x16xbf16>, vector<8x16xbf16>, vector<8x8xf32> -> vector<8x8xf32>
    %cst_42 = arith.constant dense<0xFF800000> : vector<8xf32>
    %107 = vector.multi_reduction <maximumf>, %106, %cst_42 [1] : vector<8x8xf32> to vector<8xf32>
    %108 = vector.shape_cast %107 : vector<8xf32> to vector<8x1xf32>
    %109 = vector.broadcast %108 : vector<8x1xf32> to vector<8x8xf32>
    %110 = arith.subf %106, %109 : vector<8x8xf32>
    %111 = math.exp %110 : vector<8x8xf32>
    %cst_43 = arith.constant dense<0.000000e+00> : vector<8xf32>
    %112 = vector.multi_reduction <add>, %111, %cst_43 [1] : vector<8x8xf32> to vector<8xf32>
    %113 = vector.shape_cast %112 : vector<8xf32> to vector<8x1xf32>
    %114 = tpu.reciprocal %113 {approx = true} : vector<8x1xf32> -> vector<8x1xf32>
    %115 = vector.broadcast %114 : vector<8x1xf32> to vector<8x8xf32>
    %116 = arith.mulf %111, %115 : vector<8x8xf32>
    %117 = arith.truncf %116 : vector<8x8xf32> to vector<8x8xbf16>
    %cst_44 = arith.constant dense<0.000000e+00> : vector<8x16xf32>
    %118 = tpu.matmul %117, %105, %cst_44 {dimension_numbers = #tpu.dot_dimension_numbers<[1], [0], [0], [1], [0, 0, 1, 1], [], []>} : vector<8x8xbf16>, vector<8x16xbf16>, vector<8x16xf32> -> vector<8x16xf32>
    %119 = vector.extract_strided_slice %99 {offsets = [0, 16], sizes = [8, 16], strides = [1, 1]} : vector<8x96xf32> to vector<8x16xf32>
    %120 = arith.truncf %119 : vector<8x16xf32> to vector<8x16xbf16>
    %121 = vector.extract_strided_slice %99 {offsets = [0, 48], sizes = [8, 16], strides = [1, 1]} : vector<8x96xf32> to vector<8x16xf32>
    %122 = arith.truncf %121 : vector<8x16xf32> to vector<8x16xbf16>
    %123 = vector.extract_strided_slice %99 {offsets = [0, 80], sizes = [8, 16], strides = [1, 1]} : vector<8x96xf32> to vector<8x16xf32>
    %124 = arith.truncf %123 : vector<8x16xf32> to vector<8x16xbf16>
    %cst_45 = arith.constant dense<0.000000e+00> : vector<8x8xf32>
    %125 = tpu.matmul %120, %122, %cst_45 {dimension_numbers = #tpu.dot_dimension_numbers<[1], [1], [0], [0], [0, 0, 1, 0], [], []>} : vector<8x16xbf16>, vector<8x16xbf16>, vector<8x8xf32> -> vector<8x8xf32>
    %cst_46 = arith.constant dense<0xFF800000> : vector<8xf32>
    %126 = vector.multi_reduction <maximumf>, %125, %cst_46 [1] : vector<8x8xf32> to vector<8xf32>
    %127 = vector.shape_cast %126 : vector<8xf32> to vector<8x1xf32>
    %128 = vector.broadcast %127 : vector<8x1xf32> to vector<8x8xf32>
    %129 = arith.subf %125, %128 : vector<8x8xf32>
    %130 = math.exp %129 : vector<8x8xf32>
    %cst_47 = arith.constant dense<0.000000e+00> : vector<8xf32>
    %131 = vector.multi_reduction <add>, %130, %cst_47 [1] : vector<8x8xf32> to vector<8xf32>
    %132 = vector.shape_cast %131 : vector<8xf32> to vector<8x1xf32>
    %133 = tpu.reciprocal %132 {approx = true} : vector<8x1xf32> -> vector<8x1xf32>
    %134 = vector.broadcast %133 : vector<8x1xf32> to vector<8x8xf32>
    %135 = arith.mulf %130, %134 : vector<8x8xf32>
    %136 = arith.truncf %135 : vector<8x8xf32> to vector<8x8xbf16>
    %cst_48 = arith.constant dense<0.000000e+00> : vector<8x16xf32>
    %137 = tpu.matmul %136, %124, %cst_48 {dimension_numbers = #tpu.dot_dimension_numbers<[1], [0], [0], [1], [0, 0, 1, 1], [], []>} : vector<8x8xbf16>, vector<8x16xbf16>, vector<8x16xf32> -> vector<8x16xf32>
    %138 = tpu.concatenate %118, %137 in 1 : vector<8x16xf32>, vector<8x16xf32> -> vector<8x32xf32>
    %139 = tpu.concatenate %98, %138 in 0 : vector<8x32xf32>, vector<8x32xf32> -> vector<16x32xf32>
    %140 = arith.truncf %139 : vector<16x32xf32> to vector<16x32xbf16>
    %cst_49 = arith.constant dense<0.000000e+00> : vector<16x32xf32>
    %141 = tpu.matmul %140, %7, %cst_49 {dimension_numbers = #tpu.dot_dimension_numbers<[1], [0], [0], [1], [0, 0, 1, 1], [], []>} : vector<16x32xbf16>, vector<32x32xbf16>, vector<16x32xf32> -> vector<16x32xf32>
    %142 = vector.broadcast %13 : vector<1x32xf32> to vector<16x32xf32>
    %143 = arith.addf %141, %142 : vector<16x32xf32>
    %144 = arith.addf %143, %54 : vector<16x32xf32>
    %cst_50 = arith.constant dense<0.000000e+00> : vector<16xf32>
    %145 = vector.multi_reduction <add>, %144, %cst_50 [1] : vector<16x32xf32> to vector<16xf32>
    %146 = vector.shape_cast %145 : vector<16xf32> to vector<16x1xf32>
    %cst_51 = arith.constant 3.200000e+01 : f32
    %147 = vector.broadcast %cst_51 : f32 to vector<16x1xf32>
    %148 = arith.divf %146, %147 : vector<16x1xf32>
    %149 = vector.broadcast %148 : vector<16x1xf32> to vector<16x32xf32>
    %150 = arith.subf %144, %149 : vector<16x32xf32>
    %151 = arith.mulf %150, %150 : vector<16x32xf32>
    %cst_52 = arith.constant dense<0.000000e+00> : vector<16xf32>
    %152 = vector.multi_reduction <add>, %151, %cst_52 [1] : vector<16x32xf32> to vector<16xf32>
    %153 = vector.shape_cast %152 : vector<16xf32> to vector<16x1xf32>
    %cst_53 = arith.constant 3.200000e+01 : f32
    %154 = vector.broadcast %cst_53 : f32 to vector<16x1xf32>
    %155 = arith.divf %153, %154 : vector<16x1xf32>
    %cst_54 = arith.constant 9.99999996E-13 : f32
    %156 = vector.broadcast %cst_54 : f32 to vector<16x1xf32>
    %157 = arith.addf %155, %156 : vector<16x1xf32>
    %158 = math.rsqrt %157 : vector<16x1xf32>
    %159 = vector.broadcast %158 : vector<16x1xf32> to vector<16x32xf32>
    %160 = arith.mulf %150, %159 : vector<16x32xf32>
    %161 = vector.broadcast %14 : vector<1x32xf32> to vector<16x32xf32>
    %162 = arith.mulf %160, %161 : vector<16x32xf32>
    %163 = vector.broadcast %15 : vector<1x32xf32> to vector<16x32xf32>
    %164 = arith.addf %162, %163 : vector<16x32xf32>
    %165 = arith.truncf %164 : vector<16x32xf32> to vector<16x32xbf16>
    %cst_55 = arith.constant dense<0.000000e+00> : vector<16x64xf32>
    %166 = tpu.matmul %165, %6, %cst_55 {dimension_numbers = #tpu.dot_dimension_numbers<[1], [0], [0], [1], [0, 0, 1, 1], [], []>} : vector<16x32xbf16>, vector<32x64xbf16>, vector<16x64xf32> -> vector<16x64xf32>
    %167 = vector.broadcast %16 : vector<1x64xf32> to vector<16x64xf32>
    %168 = arith.addf %166, %167 : vector<16x64xf32>
    %cst_56 = arith.constant 5.000000e-01 : f32
    %169 = vector.broadcast %cst_56 : f32 to vector<16x64xf32>
    %170 = arith.mulf %169, %168 : vector<16x64xf32>
    %cst_57 = arith.constant 4.471500e-02 : f32
    %171 = vector.broadcast %cst_57 : f32 to vector<16x64xf32>
    %172 = arith.mulf %171, %168 : vector<16x64xf32>
    %173 = arith.mulf %172, %168 : vector<16x64xf32>
    %174 = arith.mulf %173, %168 : vector<16x64xf32>
    %175 = arith.addf %168, %174 : vector<16x64xf32>
    %cst_58 = arith.constant 0.797884583 : f32
    %176 = vector.broadcast %cst_58 : f32 to vector<16x64xf32>
    %177 = arith.mulf %176, %175 : vector<16x64xf32>
    %178 = math.tanh %177 : vector<16x64xf32>
    %cst_59 = arith.constant 1.000000e+00 : f32
    %179 = vector.broadcast %cst_59 : f32 to vector<16x64xf32>
    %180 = arith.addf %179, %178 : vector<16x64xf32>
    %181 = arith.mulf %170, %180 : vector<16x64xf32>
    %182 = arith.truncf %181 : vector<16x64xf32> to vector<16x64xbf16>
    %cst_60 = arith.constant dense<0.000000e+00> : vector<16x32xf32>
    %183 = tpu.matmul %182, %4, %cst_60 {dimension_numbers = #tpu.dot_dimension_numbers<[1], [0], [0], [1], [0, 0, 1, 1], [], []>} : vector<16x64xbf16>, vector<64x32xbf16>, vector<16x32xf32> -> vector<16x32xf32>
    %184 = vector.broadcast %17 : vector<1x32xf32> to vector<16x32xf32>
    %185 = arith.addf %183, %184 : vector<16x32xf32>
    %186 = arith.addf %185, %164 : vector<16x32xf32>
    %cst_61 = arith.constant dense<0.000000e+00> : vector<16xf32>
    %187 = vector.multi_reduction <add>, %186, %cst_61 [1] : vector<16x32xf32> to vector<16xf32>
    %188 = vector.shape_cast %187 : vector<16xf32> to vector<16x1xf32>
    %cst_62 = arith.constant 3.200000e+01 : f32
    %189 = vector.broadcast %cst_62 : f32 to vector<16x1xf32>
    %190 = arith.divf %188, %189 : vector<16x1xf32>
    %191 = vector.broadcast %190 : vector<16x1xf32> to vector<16x32xf32>
    %192 = arith.subf %186, %191 : vector<16x32xf32>
    %193 = arith.mulf %192, %192 : vector<16x32xf32>
    %cst_63 = arith.constant dense<0.000000e+00> : vector<16xf32>
    %194 = vector.multi_reduction <add>, %193, %cst_63 [1] : vector<16x32xf32> to vector<16xf32>
    %195 = vector.shape_cast %194 : vector<16xf32> to vector<16x1xf32>
    %cst_64 = arith.constant 3.200000e+01 : f32
    %196 = vector.broadcast %cst_64 : f32 to vector<16x1xf32>
    %197 = arith.divf %195, %196 : vector<16x1xf32>
    %cst_65 = arith.constant 9.99999996E-13 : f32
    %198 = vector.broadcast %cst_65 : f32 to vector<16x1xf32>
    %199 = arith.addf %197, %198 : vector<16x1xf32>
    %200 = math.rsqrt %199 : vector<16x1xf32>
    %201 = vector.broadcast %200 : vector<16x1xf32> to vector<16x32xf32>
    %202 = arith.mulf %192, %201 : vector<16x32xf32>
    %203 = vector.broadcast %18 : vector<1x32xf32> to vector<16x32xf32>
    %204 = arith.mulf %202, %203 : vector<16x32xf32>
    %205 = vector.broadcast %19 : vector<1x32xf32> to vector<16x32xf32>
    %206 = arith.addf %204, %205 : vector<16x32xf32>
    %207 = arith.truncf %206 : vector<16x32xf32> to vector<16x32xbf16>
    %cst_66 = arith.constant dense<0.000000e+00> : vector<16x96xf32>
    %208 = tpu.matmul %207, %5, %cst_66 {dimension_numbers = #tpu.dot_dimension_numbers<[1], [0], [0], [1], [0, 0, 1, 1], [], []>} : vector<16x32xbf16>, vector<32x96xbf16>, vector<16x96xf32> -> vector<16x96xf32>
    %209 = vector.broadcast %12 : vector<1x96xf32> to vector<16x96xf32>
    %210 = arith.addf %208, %209 : vector<16x96xf32>
    %211 = vector.extract_strided_slice %210 {offsets = [0, 0], sizes = [8, 96], strides = [1, 1]} : vector<16x96xf32> to vector<8x96xf32>
    %212 = vector.extract_strided_slice %211 {offsets = [0, 0], sizes = [8, 16], strides = [1, 1]} : vector<8x96xf32> to vector<8x16xf32>
    %213 = arith.truncf %212 : vector<8x16xf32> to vector<8x16xbf16>
    %214 = vector.extract_strided_slice %211 {offsets = [0, 32], sizes = [8, 16], strides = [1, 1]} : vector<8x96xf32> to vector<8x16xf32>
    %215 = arith.truncf %214 : vector<8x16xf32> to vector<8x16xbf16>
    %216 = vector.extract_strided_slice %211 {offsets = [0, 64], sizes = [8, 16], strides = [1, 1]} : vector<8x96xf32> to vector<8x16xf32>
    %217 = arith.truncf %216 : vector<8x16xf32> to vector<8x16xbf16>
    %cst_67 = arith.constant dense<0.000000e+00> : vector<8x8xf32>
    %218 = tpu.matmul %213, %215, %cst_67 {dimension_numbers = #tpu.dot_dimension_numbers<[1], [1], [0], [0], [0, 0, 1, 0], [], []>} : vector<8x16xbf16>, vector<8x16xbf16>, vector<8x8xf32> -> vector<8x8xf32>
    %cst_68 = arith.constant dense<0xFF800000> : vector<8xf32>
    %219 = vector.multi_reduction <maximumf>, %218, %cst_68 [1] : vector<8x8xf32> to vector<8xf32>
    %220 = vector.shape_cast %219 : vector<8xf32> to vector<8x1xf32>
    %221 = vector.broadcast %220 : vector<8x1xf32> to vector<8x8xf32>
    %222 = arith.subf %218, %221 : vector<8x8xf32>
    %223 = math.exp %222 : vector<8x8xf32>
    %cst_69 = arith.constant dense<0.000000e+00> : vector<8xf32>
    %224 = vector.multi_reduction <add>, %223, %cst_69 [1] : vector<8x8xf32> to vector<8xf32>
    %225 = vector.shape_cast %224 : vector<8xf32> to vector<8x1xf32>
    %226 = tpu.reciprocal %225 {approx = true} : vector<8x1xf32> -> vector<8x1xf32>
    %227 = vector.broadcast %226 : vector<8x1xf32> to vector<8x8xf32>
    %228 = arith.mulf %223, %227 : vector<8x8xf32>
    %229 = arith.truncf %228 : vector<8x8xf32> to vector<8x8xbf16>
    %cst_70 = arith.constant dense<0.000000e+00> : vector<8x16xf32>
    %230 = tpu.matmul %229, %217, %cst_70 {dimension_numbers = #tpu.dot_dimension_numbers<[1], [0], [0], [1], [0, 0, 1, 1], [], []>} : vector<8x8xbf16>, vector<8x16xbf16>, vector<8x16xf32> -> vector<8x16xf32>
    %231 = vector.extract_strided_slice %211 {offsets = [0, 16], sizes = [8, 16], strides = [1, 1]} : vector<8x96xf32> to vector<8x16xf32>
    %232 = arith.truncf %231 : vector<8x16xf32> to vector<8x16xbf16>
    %233 = vector.extract_strided_slice %211 {offsets = [0, 48], sizes = [8, 16], strides = [1, 1]} : vector<8x96xf32> to vector<8x16xf32>
    %234 = arith.truncf %233 : vector<8x16xf32> to vector<8x16xbf16>
    %235 = vector.extract_strided_slice %211 {offsets = [0, 80], sizes = [8, 16], strides = [1, 1]} : vector<8x96xf32> to vector<8x16xf32>
    %236 = arith.truncf %235 : vector<8x16xf32> to vector<8x16xbf16>
    %cst_71 = arith.constant dense<0.000000e+00> : vector<8x8xf32>
    %237 = tpu.matmul %232, %234, %cst_71 {dimension_numbers = #tpu.dot_dimension_numbers<[1], [1], [0], [0], [0, 0, 1, 0], [], []>} : vector<8x16xbf16>, vector<8x16xbf16>, vector<8x8xf32> -> vector<8x8xf32>
    %cst_72 = arith.constant dense<0xFF800000> : vector<8xf32>
    %238 = vector.multi_reduction <maximumf>, %237, %cst_72 [1] : vector<8x8xf32> to vector<8xf32>
    %239 = vector.shape_cast %238 : vector<8xf32> to vector<8x1xf32>
    %240 = vector.broadcast %239 : vector<8x1xf32> to vector<8x8xf32>
    %241 = arith.subf %237, %240 : vector<8x8xf32>
    %242 = math.exp %241 : vector<8x8xf32>
    %cst_73 = arith.constant dense<0.000000e+00> : vector<8xf32>
    %243 = vector.multi_reduction <add>, %242, %cst_73 [1] : vector<8x8xf32> to vector<8xf32>
    %244 = vector.shape_cast %243 : vector<8xf32> to vector<8x1xf32>
    %245 = tpu.reciprocal %244 {approx = true} : vector<8x1xf32> -> vector<8x1xf32>
    %246 = vector.broadcast %245 : vector<8x1xf32> to vector<8x8xf32>
    %247 = arith.mulf %242, %246 : vector<8x8xf32>
    %248 = arith.truncf %247 : vector<8x8xf32> to vector<8x8xbf16>
    %cst_74 = arith.constant dense<0.000000e+00> : vector<8x16xf32>
    %249 = tpu.matmul %248, %236, %cst_74 {dimension_numbers = #tpu.dot_dimension_numbers<[1], [0], [0], [1], [0, 0, 1, 1], [], []>} : vector<8x8xbf16>, vector<8x16xbf16>, vector<8x16xf32> -> vector<8x16xf32>
    %250 = tpu.concatenate %230, %249 in 1 : vector<8x16xf32>, vector<8x16xf32> -> vector<8x32xf32>
    %251 = vector.extract_strided_slice %210 {offsets = [8, 0], sizes = [8, 96], strides = [1, 1]} : vector<16x96xf32> to vector<8x96xf32>
    %252 = vector.extract_strided_slice %251 {offsets = [0, 0], sizes = [8, 16], strides = [1, 1]} : vector<8x96xf32> to vector<8x16xf32>
    %253 = arith.truncf %252 : vector<8x16xf32> to vector<8x16xbf16>
    %254 = vector.extract_strided_slice %251 {offsets = [0, 32], sizes = [8, 16], strides = [1, 1]} : vector<8x96xf32> to vector<8x16xf32>
    %255 = arith.truncf %254 : vector<8x16xf32> to vector<8x16xbf16>
    %256 = vector.extract_strided_slice %251 {offsets = [0, 64], sizes = [8, 16], strides = [1, 1]} : vector<8x96xf32> to vector<8x16xf32>
    %257 = arith.truncf %256 : vector<8x16xf32> to vector<8x16xbf16>
    %cst_75 = arith.constant dense<0.000000e+00> : vector<8x8xf32>
    %258 = tpu.matmul %253, %255, %cst_75 {dimension_numbers = #tpu.dot_dimension_numbers<[1], [1], [0], [0], [0, 0, 1, 0], [], []>} : vector<8x16xbf16>, vector<8x16xbf16>, vector<8x8xf32> -> vector<8x8xf32>
    %cst_76 = arith.constant dense<0xFF800000> : vector<8xf32>
    %259 = vector.multi_reduction <maximumf>, %258, %cst_76 [1] : vector<8x8xf32> to vector<8xf32>
    %260 = vector.shape_cast %259 : vector<8xf32> to vector<8x1xf32>
    %261 = vector.broadcast %260 : vector<8x1xf32> to vector<8x8xf32>
    %262 = arith.subf %258, %261 : vector<8x8xf32>
    %263 = math.exp %262 : vector<8x8xf32>
    %cst_77 = arith.constant dense<0.000000e+00> : vector<8xf32>
    %264 = vector.multi_reduction <add>, %263, %cst_77 [1] : vector<8x8xf32> to vector<8xf32>
    %265 = vector.shape_cast %264 : vector<8xf32> to vector<8x1xf32>
    %266 = tpu.reciprocal %265 {approx = true} : vector<8x1xf32> -> vector<8x1xf32>
    %267 = vector.broadcast %266 : vector<8x1xf32> to vector<8x8xf32>
    %268 = arith.mulf %263, %267 : vector<8x8xf32>
    %269 = arith.truncf %268 : vector<8x8xf32> to vector<8x8xbf16>
    %cst_78 = arith.constant dense<0.000000e+00> : vector<8x16xf32>
    %270 = tpu.matmul %269, %257, %cst_78 {dimension_numbers = #tpu.dot_dimension_numbers<[1], [0], [0], [1], [0, 0, 1, 1], [], []>} : vector<8x8xbf16>, vector<8x16xbf16>, vector<8x16xf32> -> vector<8x16xf32>
    %271 = vector.extract_strided_slice %251 {offsets = [0, 16], sizes = [8, 16], strides = [1, 1]} : vector<8x96xf32> to vector<8x16xf32>
    %272 = arith.truncf %271 : vector<8x16xf32> to vector<8x16xbf16>
    %273 = vector.extract_strided_slice %251 {offsets = [0, 48], sizes = [8, 16], strides = [1, 1]} : vector<8x96xf32> to vector<8x16xf32>
    %274 = arith.truncf %273 : vector<8x16xf32> to vector<8x16xbf16>
    %275 = vector.extract_strided_slice %251 {offsets = [0, 80], sizes = [8, 16], strides = [1, 1]} : vector<8x96xf32> to vector<8x16xf32>
    %276 = arith.truncf %275 : vector<8x16xf32> to vector<8x16xbf16>
    %cst_79 = arith.constant dense<0.000000e+00> : vector<8x8xf32>
    %277 = tpu.matmul %272, %274, %cst_79 {dimension_numbers = #tpu.dot_dimension_numbers<[1], [1], [0], [0], [0, 0, 1, 0], [], []>} : vector<8x16xbf16>, vector<8x16xbf16>, vector<8x8xf32> -> vector<8x8xf32>
    %cst_80 = arith.constant dense<0xFF800000> : vector<8xf32>
    %278 = vector.multi_reduction <maximumf>, %277, %cst_80 [1] : vector<8x8xf32> to vector<8xf32>
    %279 = vector.shape_cast %278 : vector<8xf32> to vector<8x1xf32>
    %280 = vector.broadcast %279 : vector<8x1xf32> to vector<8x8xf32>
    %281 = arith.subf %277, %280 : vector<8x8xf32>
    %282 = math.exp %281 : vector<8x8xf32>
    %cst_81 = arith.constant dense<0.000000e+00> : vector<8xf32>
    %283 = vector.multi_reduction <add>, %282, %cst_81 [1] : vector<8x8xf32> to vector<8xf32>
    %284 = vector.shape_cast %283 : vector<8xf32> to vector<8x1xf32>
    %285 = tpu.reciprocal %284 {approx = true} : vector<8x1xf32> -> vector<8x1xf32>
    %286 = vector.broadcast %285 : vector<8x1xf32> to vector<8x8xf32>
    %287 = arith.mulf %282, %286 : vector<8x8xf32>
    %288 = arith.truncf %287 : vector<8x8xf32> to vector<8x8xbf16>
    %cst_82 = arith.constant dense<0.000000e+00> : vector<8x16xf32>
    %289 = tpu.matmul %288, %276, %cst_82 {dimension_numbers = #tpu.dot_dimension_numbers<[1], [0], [0], [1], [0, 0, 1, 1], [], []>} : vector<8x8xbf16>, vector<8x16xbf16>, vector<8x16xf32> -> vector<8x16xf32>
    %290 = tpu.concatenate %270, %289 in 1 : vector<8x16xf32>, vector<8x16xf32> -> vector<8x32xf32>
    %291 = tpu.concatenate %250, %290 in 0 : vector<8x32xf32>, vector<8x32xf32> -> vector<16x32xf32>
    %292 = arith.truncf %291 : vector<16x32xf32> to vector<16x32xbf16>
    %cst_83 = arith.constant dense<0.000000e+00> : vector<16x32xf32>
    %293 = tpu.matmul %292, %7, %cst_83 {dimension_numbers = #tpu.dot_dimension_numbers<[1], [0], [0], [1], [0, 0, 1, 1], [], []>} : vector<16x32xbf16>, vector<32x32xbf16>, vector<16x32xf32> -> vector<16x32xf32>
    %294 = vector.broadcast %13 : vector<1x32xf32> to vector<16x32xf32>
    %295 = arith.addf %293, %294 : vector<16x32xf32>
    %296 = arith.addf %295, %206 : vector<16x32xf32>
    %cst_84 = arith.constant dense<0.000000e+00> : vector<16xf32>
    %297 = vector.multi_reduction <add>, %296, %cst_84 [1] : vector<16x32xf32> to vector<16xf32>
    %298 = vector.shape_cast %297 : vector<16xf32> to vector<16x1xf32>
    %cst_85 = arith.constant 3.200000e+01 : f32
    %299 = vector.broadcast %cst_85 : f32 to vector<16x1xf32>
    %300 = arith.divf %298, %299 : vector<16x1xf32>
    %301 = vector.broadcast %300 : vector<16x1xf32> to vector<16x32xf32>
    %302 = arith.subf %296, %301 : vector<16x32xf32>
    %303 = arith.mulf %302, %302 : vector<16x32xf32>
    %cst_86 = arith.constant dense<0.000000e+00> : vector<16xf32>
    %304 = vector.multi_reduction <add>, %303, %cst_86 [1] : vector<16x32xf32> to vector<16xf32>
    %305 = vector.shape_cast %304 : vector<16xf32> to vector<16x1xf32>
    %cst_87 = arith.constant 3.200000e+01 : f32
    %306 = vector.broadcast %cst_87 : f32 to vector<16x1xf32>
    %307 = arith.divf %305, %306 : vector<16x1xf32>
    %cst_88 = arith.constant 9.99999996E-13 : f32
    %308 = vector.broadcast %cst_88 : f32 to vector<16x1xf32>
    %309 = arith.addf %307, %308 : vector<16x1xf32>
    %310 = math.rsqrt %309 : vector<16x1xf32>
    %311 = vector.broadcast %310 : vector<16x1xf32> to vector<16x32xf32>
    %312 = arith.mulf %302, %311 : vector<16x32xf32>
    %313 = vector.broadcast %14 : vector<1x32xf32> to vector<16x32xf32>
    %314 = arith.mulf %312, %313 : vector<16x32xf32>
    %315 = vector.broadcast %15 : vector<1x32xf32> to vector<16x32xf32>
    %316 = arith.addf %314, %315 : vector<16x32xf32>
    %317 = arith.truncf %316 : vector<16x32xf32> to vector<16x32xbf16>
    %cst_89 = arith.constant dense<0.000000e+00> : vector<16x64xf32>
    %318 = tpu.matmul %317, %6, %cst_89 {dimension_numbers = #tpu.dot_dimension_numbers<[1], [0], [0], [1], [0, 0, 1, 1], [], []>} : vector<16x32xbf16>, vector<32x64xbf16>, vector<16x64xf32> -> vector<16x64xf32>
    %319 = vector.broadcast %16 : vector<1x64xf32> to vector<16x64xf32>
    %320 = arith.addf %318, %319 : vector<16x64xf32>
    %cst_90 = arith.constant 5.000000e-01 : f32
    %321 = vector.broadcast %cst_90 : f32 to vector<16x64xf32>
    %322 = arith.mulf %321, %320 : vector<16x64xf32>
    %cst_91 = arith.constant 4.471500e-02 : f32
    %323 = vector.broadcast %cst_91 : f32 to vector<16x64xf32>
    %324 = arith.mulf %323, %320 : vector<16x64xf32>
    %325 = arith.mulf %324, %320 : vector<16x64xf32>
    %326 = arith.mulf %325, %320 : vector<16x64xf32>
    %327 = arith.addf %320, %326 : vector<16x64xf32>
    %cst_92 = arith.constant 0.797884583 : f32
    %328 = vector.broadcast %cst_92 : f32 to vector<16x64xf32>
    %329 = arith.mulf %328, %327 : vector<16x64xf32>
    %330 = math.tanh %329 : vector<16x64xf32>
    %cst_93 = arith.constant 1.000000e+00 : f32
    %331 = vector.broadcast %cst_93 : f32 to vector<16x64xf32>
    %332 = arith.addf %331, %330 : vector<16x64xf32>
    %333 = arith.mulf %322, %332 : vector<16x64xf32>
    %334 = arith.truncf %333 : vector<16x64xf32> to vector<16x64xbf16>
    %cst_94 = arith.constant dense<0.000000e+00> : vector<16x32xf32>
    %335 = tpu.matmul %334, %4, %cst_94 {dimension_numbers = #tpu.dot_dimension_numbers<[1], [0], [0], [1], [0, 0, 1, 1], [], []>} : vector<16x64xbf16>, vector<64x32xbf16>, vector<16x32xf32> -> vector<16x32xf32>
    %336 = vector.broadcast %17 : vector<1x32xf32> to vector<16x32xf32>
    %337 = arith.addf %335, %336 : vector<16x32xf32>
    %338 = arith.addf %337, %316 : vector<16x32xf32>
    %cst_95 = arith.constant dense<0.000000e+00> : vector<16xf32>
    %339 = vector.multi_reduction <add>, %338, %cst_95 [1] : vector<16x32xf32> to vector<16xf32>
    %340 = vector.shape_cast %339 : vector<16xf32> to vector<16x1xf32>
    %cst_96 = arith.constant 3.200000e+01 : f32
    %341 = vector.broadcast %cst_96 : f32 to vector<16x1xf32>
    %342 = arith.divf %340, %341 : vector<16x1xf32>
    %343 = vector.broadcast %342 : vector<16x1xf32> to vector<16x32xf32>
    %344 = arith.subf %338, %343 : vector<16x32xf32>
    %345 = arith.mulf %344, %344 : vector<16x32xf32>
    %cst_97 = arith.constant dense<0.000000e+00> : vector<16xf32>
    %346 = vector.multi_reduction <add>, %345, %cst_97 [1] : vector<16x32xf32> to vector<16xf32>
    %347 = vector.shape_cast %346 : vector<16xf32> to vector<16x1xf32>
    %cst_98 = arith.constant 3.200000e+01 : f32
    %348 = vector.broadcast %cst_98 : f32 to vector<16x1xf32>
    %349 = arith.divf %347, %348 : vector<16x1xf32>
    %cst_99 = arith.constant 9.99999996E-13 : f32
    %350 = vector.broadcast %cst_99 : f32 to vector<16x1xf32>
    %351 = arith.addf %349, %350 : vector<16x1xf32>
    %352 = math.rsqrt %351 : vector<16x1xf32>
    %353 = vector.broadcast %352 : vector<16x1xf32> to vector<16x32xf32>
    %354 = arith.mulf %344, %353 : vector<16x32xf32>
    %355 = vector.broadcast %18 : vector<1x32xf32> to vector<16x32xf32>
    %356 = arith.mulf %354, %355 : vector<16x32xf32>
    %357 = vector.broadcast %19 : vector<1x32xf32> to vector<16x32xf32>
    %358 = arith.addf %356, %357 : vector<16x32xf32>
    %359 = arith.truncf %358 : vector<16x32xf32> to vector<16x32xbf16>
    %cst_100 = arith.constant dense<0.000000e+00> : vector<16x2xf32>
    %360 = tpu.matmul %359, %8, %cst_100 {dimension_numbers = #tpu.dot_dimension_numbers<[1], [0], [0], [1], [0, 0, 1, 1], [], []>} : vector<16x32xbf16>, vector<32x2xbf16>, vector<16x2xf32> -> vector<16x2xf32>
    %361 = vector.broadcast %20 : vector<1x2xf32> to vector<16x2xf32>
    %362 = arith.addf %360, %361 : vector<16x2xf32>
    %c0_101 = arith.constant 0 : index
    %c0_102 = arith.constant 0 : index
    %363 = vector.load %arg5[%c0_101, %c0_102] : memref<16x2xf32, #tpu.memory_space<vmem>>, vector<16x2xf32>
    tpu.vector_store %arg5[%c0_101, %c0_102], %362 {strides = array<i32>} : memref<16x2xf32, #tpu.memory_space<vmem>>, vector<16x2xf32>,
    %c0_103 = arith.constant 0 : index
    %c1_104 = arith.constant 1 : index
    %364 = vector.load %arg0[%c0_103, %c1_104] : memref<16x2xi32, #tpu.memory_space<vmem>>, vector<16x1xi32>
    %365 = tpu.iota {dimensions = array<i32: 1>} : vector<16x2xi32>
    %366 = vector.broadcast %364 : vector<16x1xi32> to vector<16x2xi32>
    %367 = arith.cmpi eq, %365, %366 : vector<16x2xi32>
    %cst_105 = arith.constant 0.000000e+00 : f32
    %368 = vector.broadcast %cst_105 : f32 to vector<16x2xf32>
    %369 = arith.select %367, %362, %368 : vector<16x2xi1>, vector<16x2xf32>
    %cst_106 = arith.constant dense<0.000000e+00> : vector<16xf32>
    %370 = vector.multi_reduction <add>, %369, %cst_106 [1] : vector<16x2xf32> to vector<16xf32>
    %371 = vector.shape_cast %370 : vector<16xf32> to vector<16x1xf32>
    %cst_107 = arith.constant dense<0xFF800000> : vector<16xf32>
    %372 = vector.multi_reduction <maximumf>, %362, %cst_107 [1] : vector<16x2xf32> to vector<16xf32>
    %373 = vector.shape_cast %372 : vector<16xf32> to vector<16x1xf32>
    %374 = vector.broadcast %373 : vector<16x1xf32> to vector<16x2xf32>
    %375 = arith.subf %362, %374 : vector<16x2xf32>
    %376 = math.exp %375 : vector<16x2xf32>
    %cst_108 = arith.constant dense<0.000000e+00> : vector<16xf32>
    %377 = vector.multi_reduction <add>, %376, %cst_108 [1] : vector<16x2xf32> to vector<16xf32>
    %378 = vector.shape_cast %377 : vector<16xf32> to vector<16x1xf32>
    %379 = math.log %378 : vector<16x1xf32>
    %380 = arith.addf %379, %373 : vector<16x1xf32>
    %381 = arith.subf %380, %371 : vector<16x1xf32>
    %382 = vector.shape_cast %381 : vector<16x1xf32> to vector<1x16x1xf32>
    %cst_109 = arith.constant dense<0.000000e+00> : vector<1xf32>
    %383 = vector.multi_reduction <add>, %382, %cst_109 [1, 2] : vector<1x16x1xf32> to vector<1xf32>
    %384 = vector.shape_cast %383 : vector<1xf32> to vector<1x1x1xf32>
    %385 = vector.extract %384[0, 0, 0] : f32 from vector<1x1x1xf32>
    %cst_110 = arith.constant 1.600000e+01 : f32
    %386 = arith.divf %385, %cst_110 : f32
    %387 = vector.broadcast %386 : f32 to vector<1x1xf32>
    %c0_111 = arith.constant 0 : index
    %c0_112 = arith.constant 0 : index
    %388 = vector.load %arg6[%c0_111, %c0_112] : memref<1x1xf32, #tpu.memory_space<vmem>>, vector<1x1xf32>
    tpu.vector_store %arg6[%c0_111, %c0_112], %387 {strides = array<i32>} : memref<1x1xf32, #tpu.memory_space<vmem>>, vector<1x1xf32>,
    return
  }
}

</mosaic_0001>

<llo_original>
// kernel: tpu_custom_call.1
$region0: #{tpu_custom_call.1}
  #allocation0 [shape = 'u32[]', space=smem, size = 0x4, offset = 0x4, fixed_abs, tag = 'smem constant byte address 0x4 - core index']
  #allocation1 [shape = 'u32[144,128]{1,0:T(1,128)}', space=vmem, size = 0x12000, scoped, tag = 'internal scratch']
  %s0 = inlined_call_operand.vmem [shape: s32[16,2], index: 0, kind: input, shape index: {}]
  %s1 = inlined_call_operand.vmem [shape: bf16[136,16], index: 1, kind: input, shape index: {}]
  %s2 = inlined_call_operand.vmem [shape: bf16[80,32], index: 2, kind: input, shape index: {}]
  %s3 = inlined_call_operand.vmem [shape: bf16[32,512], index: 3, kind: input, shape index: {}]
  %s4 = inlined_call_operand.vmem [shape: f32[12,128], index: 4, kind: input, shape index: {}]
  %s5 = inlined_call_operand.vmem [shape: f32[16,2], index: 5, kind: output, shape index: {0}]
  %s6 = inlined_call_operand.hbm [shape: f32[1,1], index: 6, kind: output, shape index: {1}]
  %7 = xla_tuple %s5, %s6
  %s8 = sld [smem:[#allocation0]]
  $region38: #{tpu_custom_call.1} parent=0
    _
  %s10 = ssub.s32 1, %s8
  %s11 = scalar_select 0, %s10, %s8
  $region1: #{tpu_custom_call.1} parent=0
    #allocation2 [shape = 'u8[512]{0}', space=vmem, size = 0x400, scoped, tag = 'output window, operand 1, single buffered']
    #allocation3 [shape = 's32[1]{0}', space=sflag, size = 0x4, scoped, tag = 'scoped memory for tpu_custom_call.1']
    %12 = vsyncpa [#allocation3], 0
    // Predicated region
    $region2: #{tpu_custom_call.1} parent=1 // pred_check
      _
    $region3: #{tpu_custom_call.1} parent=1 // pred_check_branch
      %14 = sbr.rel (0) target = $region5
    $region4: #{tpu_custom_call.1} parent=1 // pred_region
      _
    $region5: #{tpu_custom_call.1} parent=1 // pred_fallthru
      _
    // Predicated region
    $region6: #{tpu_custom_call.1} parent=1 // pred_check
      _
    $region7: #{tpu_custom_call.1} parent=1 // pred_check_branch
      %16 = sbr.rel (0) target = $region9
    $region8: #{tpu_custom_call.1} parent=1 // pred_region
      _
    $region9: #{tpu_custom_call.1} parent=1 // pred_fallthru
      _
    // Predicated region
    $region10: #{tpu_custom_call.1} parent=1 // pred_check
      _
    $region11: #{tpu_custom_call.1} parent=1 // pred_check_branch
      %18 = sbr.rel (0) target = $region13
    $region12: #{tpu_custom_call.1} parent=1 // pred_region
      _
    $region13: #{tpu_custom_call.1} parent=1 // pred_fallthru
      _
    // Predicated region
    $region14: #{tpu_custom_call.1} parent=1 // pred_check
      _
    $region15: #{tpu_custom_call.1} parent=1 // pred_check_branch
      %20 = sbr.rel (0) target = $region17
    $region16: #{tpu_custom_call.1} parent=1 // pred_region
      _
    $region17: #{tpu_custom_call.1} parent=1 // pred_fallthru
      _
    // Predicated region
    $region18: #{tpu_custom_call.1} parent=1 // pred_check
      _
    $region19: #{tpu_custom_call.1} parent=1 // pred_check_branch
      %22 = sbr.rel (0) target = $region21
    $region20: #{tpu_custom_call.1} parent=1 // pred_region
      _
    $region21: #{tpu_custom_call.1} parent=1 // pred_fallthru
      _
    %v24 = vld [vmem:[%s1] sm:$0xf]
    %v25 = vld [vmem:[%s1 + $0x4] sm:$0xf]
    %v26 = vld [vmem:[%s1 + $0x8] sm:$0xf]
    %v27 = vld [vmem:[%s1 + $0xc] sm:$0xf]
    %v28 = vld [vmem:[%s1 + $0x10] sm:$0xf]
    %v29 = vld [vmem:[%s1 + $0x14] sm:$0xf]
    %v30 = vld [vmem:[%s1 + $0x18] sm:$0xf]
    %v31 = vld [vmem:[%s1 + $0x1c] sm:$0xf]
    %v32 = vld [vmem:[%s1 + $0x20] sm:$0xf]
    %v33 = vld [vmem:[%s1 + $0x24] sm:$0xf]
    %v34 = vld [vmem:[%s1 + $0x28] sm:$0xf]
    %v35 = vld [vmem:[%s1 + $0x2c] sm:$0xf]
    %v36 = vld [vmem:[%s1 + $0x30] sm:$0xf]
    %v37 = vld [vmem:[%s1 + $0x34] sm:$0xf]
    %v38 = vld [vmem:[%s1 + $0x38] sm:$0xf]
    %v39 = vld [vmem:[%s1 + $0x3c] sm:$0xf]
    %v40 = vld [vmem:[%s1 + $0x40] sm:$0xf]
    %v41 = vunpack.c.l.bf16 %v40
    %v42 = vld [vmem:[%s2] sm:$0xf]
    %v43 = vld [vmem:[%s2 + $0x4] sm:$0xf]
    %v44 = vld [vmem:[%s2 + $0x8] sm:$0xf]
    %v45 = vld [vmem:[%s2 + $0xc] sm:$0xf]
    %v46 = vld [vmem:[%s2 + $0x10] sm:$0xf]
    %v47 = vld [vmem:[%s2 + $0x14] sm:$0xf]
    %v48 = vld [vmem:[%s2 + $0x18] sm:$0xf]
    %v49 = vld [vmem:[%s2 + $0x1c] sm:$0xf]
    %v50 = vld [vmem:[%s2 + $0x20] sm:$0xf]
    %v51 = vld [vmem:[%s2 + $0x24] sm:$0xf]
    %v52 = vld [vmem:[%s3] sm:$0xf]
    %v53 = vld [vmem:[%s3 + $0x10] sm:$0xf]
    %v54 = vld [vmem:[%s3 + $0x20] sm:$0xf]
    %v55 = vld [vmem:[%s3 + $0x30] sm:$0xf]
    %v56 = vld [vmem:[%s3 + $0x4] sm:$0xf]
    %v57 = vld [vmem:[%s3 + $0x14] sm:$0xf]
    %v58 = vld [vmem:[%s3 + $0x24] sm:$0xf]
    %v59 = vld [vmem:[%s3 + $0x34] sm:$0xf]
    %v60 = vld [vmem:[%s3 + $0x8] sm:$0xf]
    %v61 = vld [vmem:[%s3 + $0x18] sm:$0xf]
    %v62 = vld [vmem:[%s3 + $0x28] sm:$0xf]
    %v63 = vld [vmem:[%s3 + $0x38] sm:$0xf]
    %v64 = vld [vmem:[%s3 + $0xc] sm:$0xf]
    %v65 = vld [vmem:[%s3 + $0x1c] sm:$0xf]
    %v66 = vld [vmem:[%s3 + $0x2c] sm:$0xf]
    %v67 = vld [vmem:[%s3 + $0x3c] sm:$0xf]
    %v68 = vld [vmem:[%s4] sm:$0x1]
    %v69 = vld [vmem:[%s4 + $0x1] sm:$0x1]
    %v70 = vld [vmem:[%s4 + $0x2] sm:$0x1]
    %v71 = vld [vmem:[%s4 + $0x3] sm:$0x1]
    %v72 = vld [vmem:[%s4 + $0x4] sm:$0x1]
    %v73 = vld [vmem:[%s4 + $0x5] sm:$0x1]
    %v74 = vld [vmem:[%s4 + $0x6] sm:$0x1]
    %v75 = vld [vmem:[%s4 + $0x7] sm:$0x1]
    %v76 = vld [vmem:[%s4 + $0x8] sm:$0x1]
    %v77 = vld [vmem:[%s4 + $0x9] sm:$0x1]
    %v78 = vld [vmem:[%s4 + $0xa] sm:$0x1]
    %v79 = vld [vmem:[%s4 + $0xb] sm:$0x1]
    %v80 = vld [vmem:[%s0] sm:$0xff]
    %v81 = vld [vmem:[%s0 + $0x8] sm:$0xff]
    %v82 = vlaneseq
    %v83 = vand.u32 %v82, 127
    %84 = vset.pattern.permute.xlu0 0
    %85 = vperm.xlu0 %84, %v80
    %v86 = vpop.permute.xlu0 %85
    %87 = vset.pattern.permute.xlu0 0
    %88 = vperm.xlu0 %87, %v81
    %v89 = vpop.permute.xlu0 %88
    %vm90 = vcmp.eq.s32.totalorder %v86, %v83
    %vm91 = vcmp.eq.s32.totalorder %v89, %v83
    %v92 = vsel %vm90, 1, 0
    %v93 = vsel %vm91, 1, 0
    %v94 = vcvt.s32.f32 %v92
    %v95 = vcvt.s32.f32 %v93
    %v96 = vpack.c.bf16 %v95, %v94
    %v113 = vunpack.c.l.b16 %v24
    %v114 = vunpack.c.l.b16 %v25
    %v115 = vunpack.c.l.b16 %v26
    %v116 = vunpack.c.l.b16 %v27
    %v117 = vunpack.c.l.b16 %v28
    %v118 = vunpack.c.l.b16 %v29
    %v119 = vunpack.c.l.b16 %v30
    %v120 = vunpack.c.l.b16 %v31
    %v121 = vunpack.c.l.b16 %v32
    %v122 = vunpack.c.l.b16 %v33
    %v123 = vunpack.c.l.b16 %v34
    %v124 = vunpack.c.l.b16 %v35
    %v125 = vunpack.c.l.b16 %v36
    %v126 = vunpack.c.l.b16 %v37
    %v127 = vunpack.c.l.b16 %v38
    %v128 = vunpack.c.l.b16 %v39
    %v129 = vpack.c.b16 %v114, %v113
    %v130 = vpack.c.b16 %v116, %v115
    %v131 = vpack.c.b16 %v118, %v117
    %v132 = vpack.c.b16 %v120, %v119
    %v133 = vpack.c.b16 %v122, %v121
    %v134 = vpack.c.b16 %v124, %v123
    %v135 = vpack.c.b16 %v126, %v125
    %v136 = vpack.c.b16 %v128, %v127
    %145 = vmatprep.subr.bf16.mxu0 0
    %146 = vmatpush1.bf16.msra.mxu0 %v136
    %147 = vmatprep.subr.bf16.mxu0 0
    %148 = vmatpush1.bf16.msra.mxu0 %v135
    %149 = vmatprep.subr.bf16.mxu0 0
    %150 = vmatpush1.bf16.msra.mxu0 %v134
    %151 = vmatprep.subr.bf16.mxu0 0
    %152 = vmatpush1.bf16.msra.mxu0 %v133
    %153 = vmatprep.subr.bf16.mxu0 0
    %154 = vmatpush1.bf16.msra.mxu0 %v132
    %155 = vmatprep.subr.bf16.mxu0 0
    %156 = vmatpush1.bf16.msra.mxu0 %v131
    %157 = vmatprep.subr.bf16.mxu0 0
    %158 = vmatpush1.bf16.msra.mxu0 %v130
    %159 = vmatprep.subr.bf16.mxu0 0
    %160 = vmatpush1.bf16.msra.mxu0 %v129
    %161 = vmatprep.subr.bf16.mxu0 0
    %162 = vmatpush2.bf16.msra.mxu0 0
    %163 = vmatprep.subr.bf16.mxu0 0
    %164 = vmatpush2.bf16.msra.mxu0 0
    %165 = vmatprep.subr.bf16.mxu0 0
    %166 = vmatpush2.bf16.msra.mxu0 0
    %167 = vmatprep.subr.bf16.mxu0 0
    %168 = vmatpush2.bf16.msra.mxu0 0
    %169 = vmatprep.subr.bf16.mxu0 0
    %170 = vmatpush2.bf16.msra.mxu0 0
    %171 = vmatprep.subr.bf16.mxu0 0
    %172 = vmatpush2.bf16.msra.mxu0 0
    %173 = vmatprep.subr.bf16.mxu0 0
    %174 = vmatpush2.bf16.msra.mxu0 0
    %175 = vmatprep.subr.bf16.mxu0 0
    %176 = vmatpush2.bf16.msra.mxu0 0
    %177 = vmatprep.mubr.bf16.mxu0 0
    %178 = vmatmul.mubr.bf16.gmra.mxu0 %v96
    %v179 = vpop.f32.mrf.mxu0
    %v180 = vadd.f32 %v41, %v179
    %v181 = vpop.f32.mrf.mxu0
    %v182 = vpop.f32.mrf.mxu0
    %v183 = vadd.f32 %v41, %v182
    %v184 = vpop.f32.mrf.mxu0
    %185 = vdwg.mxu0
    %vm186 = vcmask 130048
    %v187 = vsel %vm186, %v180, 0.0
    %188 = vadd.xlane.f32.xlu0 %v187
    %v189 = vpop.xlane.xlu0 %188
    %v190 = vsel %vm186, %v183, 0.0
    %191 = vadd.xlane.f32.xlu0 %v190
    %v192 = vpop.xlane.xlu0 %191
    %v193 = vrcp.pop 16.0
    %v194 = vmul.f32 %v189, %v193
    %v195 = vmul.f32 %v192, %v193
    %v196 = vsub.f32 %v180, %v194
    %v197 = vsub.f32 %v183, %v195
    %v198 = vmul.f32 %v196, %v196
    %v199 = vmul.f32 %v197, %v197
    %v200 = vsel %vm186, %v198, 0.0
    %201 = vadd.xlane.f32.xlu0 %v200
    %v202 = vpop.xlane.xlu0 %201
    %v203 = vsel %vm186, %v199, 0.0
    %204 = vadd.xlane.f32.xlu0 %v203
    %v205 = vpop.xlane.xlu0 %204
    %v206 = vmul.f32 %v202, %v193
    %v207 = vmul.f32 %v205, %v193
    %v208 = vadd.f32 %v206, 1e-12
    %v209 = vadd.f32 %v207, 1e-12
    %v210 = vrsqrt.pop %v208
    %v211 = vrsqrt.pop %v209
    %v212 = vmul.f32 %v196, %v210
    %v213 = vmul.f32 %v197, %v211
    %v214 = vlaneseq
    %v215 = vshrl.u32 %v214, 7
    %v216 = vsub.s32 0, %v215
    %v217 = vrot.slane %v68, %v216
    %v218 = vmul.f32 %v212, %v217
    %v219 = vmul.f32 %v213, %v217
    %v220 = vlaneseq
    %v221 = vshrl.u32 %v220, 7
    %v222 = vsub.s32 0, %v221
    %v223 = vrot.slane %v69, %v222
    %v224 = vadd.f32 %v218, %v223
    %v225 = vadd.f32 %v219, %v223
    %v226 = vpack.c.bf16 %v225, %v224
    %v227 = vlaneseq
    %v228 = vshrl.u32 %v227, 7
    %v229 = vsub.s32 0, %v228
    %v230 = vrot.slane %v70, %v229
    %v233 = vunpack.c.l.b16 %v42
    %v234 = vunpack.c.l.b16 %v43
    %v235 = vpack.c.b16 %v234, %v233
    %v238 = vsel %vm186, %v226, 0
    %240 = vmatprep.subr.bf16.mxu0 0
    %241 = vmatpush1.bf16.msra.mxu0 0
    %242 = vmatprep.subr.bf16.mxu0 0
    %243 = vmatpush1.bf16.msra.mxu0 0
    %244 = vmatprep.subr.bf16.mxu0 0
    %245 = vmatpush1.bf16.msra.mxu0 0
    %246 = vmatprep.subr.bf16.mxu0 0
    %247 = vmatpush1.bf16.msra.mxu0 0
    %248 = vmatprep.subr.bf16.mxu0 0
    %249 = vmatpush1.bf16.msra.mxu0 0
    %250 = vmatprep.subr.bf16.mxu0 0
    %251 = vmatpush1.bf16.msra.mxu0 0
    %252 = vmatprep.subr.bf16.mxu0 0
    %253 = vmatpush1.bf16.msra.mxu0 0
    %254 = vmatprep.subr.bf16.mxu0 0
    %255 = vmatpush1.bf16.msra.mxu0 %v235
    %256 = vmatprep.subr.bf16.mxu0 0
    %257 = vmatpush2.bf16.msra.mxu0 0
    %258 = vmatprep.subr.bf16.mxu0 0
    %259 = vmatpush2.bf16.msra.mxu0 0
    %260 = vmatprep.subr.bf16.mxu0 0
    %261 = vmatpush2.bf16.msra.mxu0 0
    %262 = vmatprep.subr.bf16.mxu0 0
    %263 = vmatpush2.bf16.msra.mxu0 0
    %264 = vmatprep.subr.bf16.mxu0 0
    %265 = vmatpush2.bf16.msra.mxu0 0
    %266 = vmatprep.subr.bf16.mxu0 0
    %267 = vmatpush2.bf16.msra.mxu0 0
    %268 = vmatprep.subr.bf16.mxu0 0
    %269 = vmatpush2.bf16.msra.mxu0 0
    %270 = vmatprep.subr.bf16.mxu0 0
    %271 = vmatpush2.bf16.msra.mxu0 0
    %272 = vmatprep.mubr.bf16.mxu0 0
    %273 = vmatmul.mubr.bf16.gmra.mxu0 %v238
    %v274 = vpop.f32.mrf.mxu0
    %v275 = vadd.f32 %v230, %v274
    %v276 = vpop.f32.mrf.mxu0
    %v277 = vpop.f32.mrf.mxu0
    %v278 = vadd.f32 %v230, %v277
    %v279 = vpop.f32.mrf.mxu0
    %280 = vdwg.mxu0
    %v281 = vpack.c.bf16 %v278, %v275
    %v282 = vlaneseq
    %v283 = vshrl.u32 %v282, 7
    %v284 = vsub.s32 0, %v283
    %v285 = vrot.slane %v71, %v284
    %v290 = vunpack.c.l.b16 %v52
    %v291 = vunpack.c.l.b16 %v53
    %v292 = vunpack.c.l.b16 %v54
    %v293 = vunpack.c.l.b16 %v55
    %v294 = vpack.c.b16 %v291, %v290
    %v295 = vpack.c.b16 %v293, %v292
    %vm298 = vcmask 261120
    %v300 = vsel %vm298, %v281, 0
    %302 = vmatprep.subr.bf16.mxu0 0
    %303 = vmatpush1.bf16.msra.mxu0 0
    %304 = vmatprep.subr.bf16.mxu0 0
    %305 = vmatpush1.bf16.msra.mxu0 0
    %306 = vmatprep.subr.bf16.mxu0 0
    %307 = vmatpush1.bf16.msra.mxu0 0
    %308 = vmatprep.subr.bf16.mxu0 0
    %309 = vmatpush1.bf16.msra.mxu0 0
    %310 = vmatprep.subr.bf16.mxu0 0
    %311 = vmatpush1.bf16.msra.mxu0 0
    %312 = vmatprep.subr.bf16.mxu0 0
    %313 = vmatpush1.bf16.msra.mxu0 0
    %314 = vmatprep.subr.bf16.mxu0 0
    %315 = vmatpush1.bf16.msra.mxu0 %v295
    %316 = vmatprep.subr.bf16.mxu0 0
    %317 = vmatpush1.bf16.msra.mxu0 %v294
    %318 = vmatprep.subr.bf16.mxu0 0
    %319 = vmatpush2.bf16.msra.mxu0 0
    %320 = vmatprep.subr.bf16.mxu0 0
    %321 = vmatpush2.bf16.msra.mxu0 0
    %322 = vmatprep.subr.bf16.mxu0 0
    %323 = vmatpush2.bf16.msra.mxu0 0
    %324 = vmatprep.subr.bf16.mxu0 0
    %325 = vmatpush2.bf16.msra.mxu0 0
    %326 = vmatprep.subr.bf16.mxu0 0
    %327 = vmatpush2.bf16.msra.mxu0 0
    %328 = vmatprep.subr.bf16.mxu0 0
    %329 = vmatpush2.bf16.msra.mxu0 0
    %330 = vmatprep.subr.bf16.mxu0 0
    %331 = vmatpush2.bf16.msra.mxu0 0
    %332 = vmatprep.subr.bf16.mxu0 0
    %333 = vmatpush2.bf16.msra.mxu0 0
    %334 = vmatprep.mubr.bf16.mxu0 0
    %335 = vmatmul.mubr.bf16.gmra.mxu0 %v300
    %v336 = vpop.f32.mrf.mxu0
    %v337 = vadd.f32 %v285, %v336
    %v338 = vpop.f32.mrf.mxu0
    %v339 = vpop.f32.mrf.mxu0
    %v340 = vadd.f32 %v285, %v339
    %v341 = vpop.f32.mrf.mxu0
    %342 = vdwg.mxu0
    %v343 = vpack.c.bf16 %v337, %v337
    %345 = vrot.lane.b32.xlu0 %v343, 96
    %v346 = vpop.permute.xlu0 %345
    %v348 = vsel %vm186, %v343, 0
    %v351 = vsel %vm186, %v346, 0
    %353 = vmatprep.subr.bf16.mxu0 0
    %354 = vmatpush1.bf16.xpose.msra.mxu0 0
    %355 = vmatprep.subr.bf16.mxu0 0
    %356 = vmatpush1.bf16.xpose.msra.mxu0 0
    %357 = vmatprep.subr.bf16.mxu0 0
    %358 = vmatpush1.bf16.xpose.msra.mxu0 0
    %359 = vmatprep.subr.bf16.mxu0 0
    %360 = vmatpush1.bf16.xpose.msra.mxu0 0
    %361 = vmatprep.subr.bf16.mxu0 0
    %362 = vmatpush1.bf16.xpose.msra.mxu0 0
    %363 = vmatprep.subr.bf16.mxu0 0
    %364 = vmatpush1.bf16.xpose.msra.mxu0 0
    %365 = vmatprep.subr.bf16.mxu0 0
    %366 = vmatpush1.bf16.xpose.msra.mxu0 0
    %367 = vmatprep.subr.bf16.mxu0 0
    %368 = vmatpush1.bf16.xpose.msra.mxu0 %v351
    %369 = vmatprep.subr.bf16.mxu0 0
    %370 = vmatpush2.bf16.xpose.msra.mxu0 0
    %371 = vmatprep.subr.bf16.mxu0 0
    %372 = vmatpush2.bf16.xpose.msra.mxu0 0
    %373 = vmatprep.subr.bf16.mxu0 0
    %374 = vmatpush2.bf16.xpose.msra.mxu0 0
    %375 = vmatprep.subr.bf16.mxu0 0
    %376 = vmatpush2.bf16.xpose.msra.mxu0 0
    %377 = vmatprep.subr.bf16.mxu0 0
    %378 = vmatpush2.bf16.xpose.msra.mxu0 0
    %379 = vmatprep.subr.bf16.mxu0 0
    %380 = vmatpush2.bf16.xpose.msra.mxu0 0
    %381 = vmatprep.subr.bf16.mxu0 0
    %382 = vmatpush2.bf16.xpose.msra.mxu0 0
    %383 = vmatprep.subr.bf16.mxu0 0
    %384 = vmatpush2.bf16.xpose.msra.mxu0 0
    %385 = vmatprep.mubr.bf16.mxu0 0
    %386 = vmatmul.mubr.bf16.gmra.mxu0 %v348
    %v387 = vpop.f32.mrf.mxu0
    %v388 = vadd.f32 0.0, %v387
    %v389 = vpop.f32.mrf.mxu0
    %v390 = vpop.f32.mrf.mxu0
    %v391 = vpop.f32.mrf.mxu0
    %392 = vdwg.mxu0
    %vm393 = vcmask 64512
    %v394 = vsel %vm393, %v388, -inf
    %395 = vmax.xlane.f32.xlu0 %v394
    %v396 = vpop.xlane.xlu0 %395
    %v397 = vsub.f32 %v388, %v396
    %v398 = vmul.f32 %v397, 1.442695
    %v399 = vpow.pop %v398
    %v400 = vsel %vm393, %v399, 0.0
    %401 = vadd.xlane.f32.xlu0 %v400
    %v402 = vpop.xlane.xlu0 %401
    %v403 = vrcp.pop %v402
    %v404 = vmul.f32 %v399, %v403
    %v405 = vpack.c.bf16 %v404, %v404
    %406 = vrot.lane.b32.xlu0 %v343, 64
    %v407 = vpop.permute.xlu0 %406
    %v409 = vsel %vm393, %v405, 0
    %vm411 = vcmask 1043456
    %v413 = vsel %vm411, %v407, 0
    %415 = vmatprep.subr.bf16.mxu0 0
    %416 = vmatpush1.bf16.msra.mxu0 0
    %417 = vmatprep.subr.bf16.mxu0 0
    %418 = vmatpush1.bf16.msra.mxu0 0
    %419 = vmatprep.subr.bf16.mxu0 0
    %420 = vmatpush1.bf16.msra.mxu0 0
    %421 = vmatprep.subr.bf16.mxu0 0
    %422 = vmatpush1.bf16.msra.mxu0 0
    %423 = vmatprep.subr.bf16.mxu0 0
    %424 = vmatpush1.bf16.msra.mxu0 0
    %425 = vmatprep.subr.bf16.mxu0 0
    %426 = vmatpush1.bf16.msra.mxu0 0
    %427 = vmatprep.subr.bf16.mxu0 0
    %428 = vmatpush1.bf16.msra.mxu0 0
    %429 = vmatprep.subr.bf16.mxu0 0
    %430 = vmatpush1.bf16.msra.mxu0 %v413
    %431 = vmatprep.subr.bf16.mxu0 0
    %432 = vmatpush2.bf16.msra.mxu0 0
    %433 = vmatprep.subr.bf16.mxu0 0
    %434 = vmatpush2.bf16.msra.mxu0 0
    %435 = vmatprep.subr.bf16.mxu0 0
    %436 = vmatpush2.bf16.msra.mxu0 0
    %437 = vmatprep.subr.bf16.mxu0 0
    %438 = vmatpush2.bf16.msra.mxu0 0
    %439 = vmatprep.subr.bf16.mxu0 0
    %440 = vmatpush2.bf16.msra.mxu0 0
    %441 = vmatprep.subr.bf16.mxu0 0
    %442 = vmatpush2.bf16.msra.mxu0 0
    %443 = vmatprep.subr.bf16.mxu0 0
    %444 = vmatpush2.bf16.msra.mxu0 0
    %445 = vmatprep.subr.bf16.mxu0 0
    %446 = vmatpush2.bf16.msra.mxu0 0
    %447 = vmatprep.mubr.bf16.mxu0 0
    %448 = vmatmul.mubr.bf16.gmra.mxu0 %v409
    %v449 = vpop.f32.mrf.mxu0
    %v450 = vadd.f32 0.0, %v449
    %v451 = vpop.f32.mrf.mxu0
    %v452 = vpop.f32.mrf.mxu0
    %v453 = vpop.f32.mrf.mxu0
    %454 = vdwg.mxu0
    %455 = vrot.lane.b32.xlu0 %v343, 112
    %v456 = vpop.permute.xlu0 %455
    %457 = vrot.lane.b32.xlu0 %v343, 80
    %v458 = vpop.permute.xlu0 %457
    %v460 = vsel %vm186, %v456, 0
    %v463 = vsel %vm186, %v458, 0
    %465 = vmatprep.subr.bf16.mxu0 0
    %466 = vmatpush1.bf16.xpose.msra.mxu0 0
    %467 = vmatprep.subr.bf16.mxu0 0
    %468 = vmatpush1.bf16.xpose.msra.mxu0 0
    %469 = vmatprep.subr.bf16.mxu0 0
    %470 = vmatpush1.bf16.xpose.msra.mxu0 0
    %471 = vmatprep.subr.bf16.mxu0 0
    %472 = vmatpush1.bf16.xpose.msra.mxu0 0
    %473 = vmatprep.subr.bf16.mxu0 0
    %474 = vmatpush1.bf16.xpose.msra.mxu0 0
    %475 = vmatprep.subr.bf16.mxu0 0
    %476 = vmatpush1.bf16.xpose.msra.mxu0 0
    %477 = vmatprep.subr.bf16.mxu0 0
    %478 = vmatpush1.bf16.xpose.msra.mxu0 0
    %479 = vmatprep.subr.bf16.mxu0 0
    %480 = vmatpush1.bf16.xpose.msra.mxu0 %v463
    %481 = vmatprep.subr.bf16.mxu0 0
    %482 = vmatpush2.bf16.xpose.msra.mxu0 0
    %483 = vmatprep.subr.bf16.mxu0 0
    %484 = vmatpush2.bf16.xpose.msra.mxu0 0
    %485 = vmatprep.subr.bf16.mxu0 0
    %486 = vmatpush2.bf16.xpose.msra.mxu0 0
    %487 = vmatprep.subr.bf16.mxu0 0
    %488 = vmatpush2.bf16.xpose.msra.mxu0 0
    %489 = vmatprep.subr.bf16.mxu0 0
    %490 = vmatpush2.bf16.xpose.msra.mxu0 0
    %491 = vmatprep.subr.bf16.mxu0 0
    %492 = vmatpush2.bf16.xpose.msra.mxu0 0
    %493 = vmatprep.subr.bf16.mxu0 0
    %494 = vmatpush2.bf16.xpose.msra.mxu0 0
    %495 = vmatprep.subr.bf16.mxu0 0
    %496 = vmatpush2.bf16.xpose.msra.mxu0 0
    %497 = vmatprep.mubr.bf16.mxu0 0
    %498 = vmatmul.mubr.bf16.gmra.mxu0 %v460
    %v499 = vpop.f32.mrf.mxu0
    %v500 = vadd.f32 0.0, %v499
    %v501 = vpop.f32.mrf.mxu0
    %v502 = vpop.f32.mrf.mxu0
    %v503 = vpop.f32.mrf.mxu0
    %504 = vdwg.mxu0
    %v505 = vsel %vm393, %v500, -inf
    %506 = vmax.xlane.f32.xlu0 %v505
    %v507 = vpop.xlane.xlu0 %506
    %v508 = vsub.f32 %v500, %v507
    %v509 = vmul.f32 %v508, 1.442695
    %v510 = vpow.pop %v509
    %v511 = vsel %vm393, %v510, 0.0
    %512 = vadd.xlane.f32.xlu0 %v511
    %v513 = vpop.xlane.xlu0 %512
    %v514 = vrcp.pop %v513
    %v515 = vmul.f32 %v510, %v514
    %v516 = vpack.c.bf16 %v515, %v515
    %517 = vrot.lane.b32.xlu0 %v343, 48
    %v518 = vpop.permute.xlu0 %517
    %v520 = vsel %vm393, %v516, 0
    %v523 = vsel %vm411, %v518, 0
    %525 = vmatprep.subr.bf16.mxu0 0
    %526 = vmatpush1.bf16.msra.mxu0 0
    %527 = vmatprep.subr.bf16.mxu0 0
    %528 = vmatpush1.bf16.msra.mxu0 0
    %529 = vmatprep.subr.bf16.mxu0 0
    %530 = vmatpush1.bf16.msra.mxu0 0
    %531 = vmatprep.subr.bf16.mxu0 0
    %532 = vmatpush1.bf16.msra.mxu0 0
    %533 = vmatprep.subr.bf16.mxu0 0
    %534 = vmatpush1.bf16.msra.mxu0 0
    %535 = vmatprep.subr.bf16.mxu0 0
    %536 = vmatpush1.bf16.msra.mxu0 0
    %537 = vmatprep.subr.bf16.mxu0 0
    %538 = vmatpush1.bf16.msra.mxu0 0
    %539 = vmatprep.subr.bf16.mxu0 0
    %540 = vmatpush1.bf16.msra.mxu0 %v523
    %541 = vmatprep.subr.bf16.mxu0 0
    %542 = vmatpush2.bf16.msra.mxu0 0
    %543 = vmatprep.subr.bf16.mxu0 0
    %544 = vmatpush2.bf16.msra.mxu0 0
    %545 = vmatprep.subr.bf16.mxu0 0
    %546 = vmatpush2.bf16.msra.mxu0 0
    %547 = vmatprep.subr.bf16.mxu0 0
    %548 = vmatpush2.bf16.msra.mxu0 0
    %549 = vmatprep.subr.bf16.mxu0 0
    %550 = vmatpush2.bf16.msra.mxu0 0
    %551 = vmatprep.subr.bf16.mxu0 0
    %552 = vmatpush2.bf16.msra.mxu0 0
    %553 = vmatprep.subr.bf16.mxu0 0
    %554 = vmatpush2.bf16.msra.mxu0 0
    %555 = vmatprep.subr.bf16.mxu0 0
    %556 = vmatpush2.bf16.msra.mxu0 0
    %557 = vmatprep.mubr.bf16.mxu0 0
    %558 = vmatmul.mubr.bf16.gmra.mxu0 %v520
    %v559 = vpop.f32.mrf.mxu0
    %v560 = vadd.f32 0.0, %v559
    %v561 = vpop.f32.mrf.mxu0
    %v562 = vpop.f32.mrf.mxu0
    %v563 = vpop.f32.mrf.mxu0
    %564 = vdwg.mxu0
    %566 = vrot.lane.b32.xlu0 %v560, 16
    %v567 = vpop.permute.xlu0 %566
    %v569 = vsel %vm186, %v450, %v567
    %v570 = vpack.c.bf16 %v340, %v340
    %572 = vrot.lane.b32.xlu0 %v570, 96
    %v573 = vpop.permute.xlu0 %572
    %v575 = vsel %vm186, %v570, 0
    %v578 = vsel %vm186, %v573, 0
    %580 = vmatprep.subr.bf16.mxu0 0
    %581 = vmatpush1.bf16.xpose.msra.mxu0 0
    %582 = vmatprep.subr.bf16.mxu0 0
    %583 = vmatpush1.bf16.xpose.msra.mxu0 0
    %584 = vmatprep.subr.bf16.mxu0 0
    %585 = vmatpush1.bf16.xpose.msra.mxu0 0
    %586 = vmatprep.subr.bf16.mxu0 0
    %587 = vmatpush1.bf16.xpose.msra.mxu0 0
    %588 = vmatprep.subr.bf16.mxu0 0
    %589 = vmatpush1.bf16.xpose.msra.mxu0 0
    %590 = vmatprep.subr.bf16.mxu0 0
    %591 = vmatpush1.bf16.xpose.msra.mxu0 0
    %592 = vmatprep.subr.bf16.mxu0 0
    %593 = vmatpush1.bf16.xpose.msra.mxu0 0
    %594 = vmatprep.subr.bf16.mxu0 0
    %595 = vmatpush1.bf16.xpose.msra.mxu0 %v578
    %596 = vmatprep.subr.bf16.mxu0 0
    %597 = vmatpush2.bf16.xpose.msra.mxu0 0
    %598 = vmatprep.subr.bf16.mxu0 0
    %599 = vmatpush2.bf16.xpose.msra.mxu0 0
    %600 = vmatprep.subr.bf16.mxu0 0
    %601 = vmatpush2.bf16.xpose.msra.mxu0 0
    %602 = vmatprep.subr.bf16.mxu0 0
    %603 = vmatpush2.bf16.xpose.msra.mxu0 0
    %604 = vmatprep.subr.bf16.mxu0 0
    %605 = vmatpush2.bf16.xpose.msra.mxu0 0
    %606 = vmatprep.subr.bf16.mxu0 0
    %607 = vmatpush2.bf16.xpose.msra.mxu0 0
    %608 = vmatprep.subr.bf16.mxu0 0
    %609 = vmatpush2.bf16.xpose.msra.mxu0 0
    %610 = vmatprep.subr.bf16.mxu0 0
    %611 = vmatpush2.bf16.xpose.msra.mxu0 0
    %612 = vmatprep.mubr.bf16.mxu0 0
    %613 = vmatmul.mubr.bf16.gmra.mxu0 %v575
    %v614 = vpop.f32.mrf.mxu0
    %v615 = vadd.f32 0.0, %v614
    %v616 = vpop.f32.mrf.mxu0
    %v617 = vpop.f32.mrf.mxu0
    %v618 = vpop.f32.mrf.mxu0
    %619 = vdwg.mxu0
    %v620 = vsel %vm393, %v615, -inf
    %621 = vmax.xlane.f32.xlu0 %v620
    %v622 = vpop.xlane.xlu0 %621
    %v623 = vsub.f32 %v615, %v622
    %v624 = vmul.f32 %v623, 1.442695
    %v625 = vpow.pop %v624
    %v626 = vsel %vm393, %v625, 0.0
    %627 = vadd.xlane.f32.xlu0 %v626
    %v628 = vpop.xlane.xlu0 %627
    %v629 = vrcp.pop %v628
    %v630 = vmul.f32 %v625, %v629
    %v631 = vpack.c.bf16 %v630, %v630
    %632 = vrot.lane.b32.xlu0 %v570, 64
    %v633 = vpop.permute.xlu0 %632
    %v635 = vsel %vm393, %v631, 0
    %v638 = vsel %vm411, %v633, 0
    %640 = vmatprep.subr.bf16.mxu0 0
    %641 = vmatpush1.bf16.msra.mxu0 0
    %642 = vmatprep.subr.bf16.mxu0 0
    %643 = vmatpush1.bf16.msra.mxu0 0
    %644 = vmatprep.subr.bf16.mxu0 0
    %645 = vmatpush1.bf16.msra.mxu0 0
    %646 = vmatprep.subr.bf16.mxu0 0
    %647 = vmatpush1.bf16.msra.mxu0 0
    %648 = vmatprep.subr.bf16.mxu0 0
    %649 = vmatpush1.bf16.msra.mxu0 0
    %650 = vmatprep.subr.bf16.mxu0 0
    %651 = vmatpush1.bf16.msra.mxu0 0
    %652 = vmatprep.subr.bf16.mxu0 0
    %653 = vmatpush1.bf16.msra.mxu0 0
    %654 = vmatprep.subr.bf16.mxu0 0
    %655 = vmatpush1.bf16.msra.mxu0 %v638
    %656 = vmatprep.subr.bf16.mxu0 0
    %657 = vmatpush2.bf16.msra.mxu0 0
    %658 = vmatprep.subr.bf16.mxu0 0
    %659 = vmatpush2.bf16.msra.mxu0 0
    %660 = vmatprep.subr.bf16.mxu0 0
    %661 = vmatpush2.bf16.msra.mxu0 0
    %662 = vmatprep.subr.bf16.mxu0 0
    %663 = vmatpush2.bf16.msra.mxu0 0
    %664 = vmatprep.subr.bf16.mxu0 0
    %665 = vmatpush2.bf16.msra.mxu0 0
    %666 = vmatprep.subr.bf16.mxu0 0
    %667 = vmatpush2.bf16.msra.mxu0 0
    %668 = vmatprep.subr.bf16.mxu0 0
    %669 = vmatpush2.bf16.msra.mxu0 0
    %670 = vmatprep.subr.bf16.mxu0 0
    %671 = vmatpush2.bf16.msra.mxu0 0
    %672 = vmatprep.mubr.bf16.mxu0 0
    %673 = vmatmul.mubr.bf16.gmra.mxu0 %v635
    %v674 = vpop.f32.mrf.mxu0
    %v675 = vadd.f32 0.0, %v674
    %v676 = vpop.f32.mrf.mxu0
    %v677 = vpop.f32.mrf.mxu0
    %v678 = vpop.f32.mrf.mxu0
    %679 = vdwg.mxu0
    %680 = vrot.lane.b32.xlu0 %v570, 112
    %v681 = vpop.permute.xlu0 %680
    %682 = vrot.lane.b32.xlu0 %v570, 80
    %v683 = vpop.permute.xlu0 %682
    %v685 = vsel %vm186, %v681, 0
    %v688 = vsel %vm186, %v683, 0
    %690 = vmatprep.subr.bf16.mxu0 0
    %691 = vmatpush1.bf16.xpose.msra.mxu0 0
    %692 = vmatprep.subr.bf16.mxu0 0
    %693 = vmatpush1.bf16.xpose.msra.mxu0 0
    %694 = vmatprep.subr.bf16.mxu0 0
    %695 = vmatpush1.bf16.xpose.msra.mxu0 0
    %696 = vmatprep.subr.bf16.mxu0 0
    %697 = vmatpush1.bf16.xpose.msra.mxu0 0
    %698 = vmatprep.subr.bf16.mxu0 0
    %699 = vmatpush1.bf16.xpose.msra.mxu0 0
    %700 = vmatprep.subr.bf16.mxu0 0
    %701 = vmatpush1.bf16.xpose.msra.mxu0 0
    %702 = vmatprep.subr.bf16.mxu0 0
    %703 = vmatpush1.bf16.xpose.msra.mxu0 0
    %704 = vmatprep.subr.bf16.mxu0 0
    %705 = vmatpush1.bf16.xpose.msra.mxu0 %v688
    %706 = vmatprep.subr.bf16.mxu0 0
    %707 = vmatpush2.bf16.xpose.msra.mxu0 0
    %708 = vmatprep.subr.bf16.mxu0 0
    %709 = vmatpush2.bf16.xpose.msra.mxu0 0
    %710 = vmatprep.subr.bf16.mxu0 0
    %711 = vmatpush2.bf16.xpose.msra.mxu0 0
    %712 = vmatprep.subr.bf16.mxu0 0
    %713 = vmatpush2.bf16.xpose.msra.mxu0 0
    %714 = vmatprep.subr.bf16.mxu0 0
    %715 = vmatpush2.bf16.xpose.msra.mxu0 0
    %716 = vmatprep.subr.bf16.mxu0 0
    %717 = vmatpush2.bf16.xpose.msra.mxu0 0
    %718 = vmatprep.subr.bf16.mxu0 0
    %719 = vmatpush2.bf16.xpose.msra.mxu0 0
    %720 = vmatprep.subr.bf16.mxu0 0
    %721 = vmatpush2.bf16.xpose.msra.mxu0 0
    %722 = vmatprep.mubr.bf16.mxu0 0
    %723 = vmatmul.mubr.bf16.gmra.mxu0 %v685
    %v724 = vpop.f32.mrf.mxu0
    %v725 = vadd.f32 0.0, %v724
    %v726 = vpop.f32.mrf.mxu0
    %v727 = vpop.f32.mrf.mxu0
    %v728 = vpop.f32.mrf.mxu0
    %729 = vdwg.mxu0
    %v730 = vsel %vm393, %v725, -inf
    %731 = vmax.xlane.f32.xlu0 %v730
    %v732 = vpop.xlane.xlu0 %731
    %v733 = vsub.f32 %v725, %v732
    %v734 = vmul.f32 %v733, 1.442695
    %v735 = vpow.pop %v734
    %v736 = vsel %vm393, %v735, 0.0
    %737 = vadd.xlane.f32.xlu0 %v736
    %v738 = vpop.xlane.xlu0 %737
    %v739 = vrcp.pop %v738
    %v740 = vmul.f32 %v735, %v739
    %v741 = vpack.c.bf16 %v740, %v740
    %742 = vrot.lane.b32.xlu0 %v570, 48
    %v743 = vpop.permute.xlu0 %742
    %v745 = vsel %vm393, %v741, 0
    %v748 = vsel %vm411, %v743, 0
    %750 = vmatprep.subr.bf16.mxu0 0
    %751 = vmatpush1.bf16.msra.mxu0 0
    %752 = vmatprep.subr.bf16.mxu0 0
    %753 = vmatpush1.bf16.msra.mxu0 0
    %754 = vmatprep.subr.bf16.mxu0 0
    %755 = vmatpush1.bf16.msra.mxu0 0
    %756 = vmatprep.subr.bf16.mxu0 0
    %757 = vmatpush1.bf16.msra.mxu0 0
    %758 = vmatprep.subr.bf16.mxu0 0
    %759 = vmatpush1.bf16.msra.mxu0 0
    %760 = vmatprep.subr.bf16.mxu0 0
    %761 = vmatpush1.bf16.msra.mxu0 0
    %762 = vmatprep.subr.bf16.mxu0 0
    %763 = vmatpush1.bf16.msra.mxu0 0
    %764 = vmatprep.subr.bf16.mxu0 0
    %765 = vmatpush1.bf16.msra.mxu0 %v748
    %766 = vmatprep.subr.bf16.mxu0 0
    %767 = vmatpush2.bf16.msra.mxu0 0
    %768 = vmatprep.subr.bf16.mxu0 0
    %769 = vmatpush2.bf16.msra.mxu0 0
    %770 = vmatprep.subr.bf16.mxu0 0
    %771 = vmatpush2.bf16.msra.mxu0 0
    %772 = vmatprep.subr.bf16.mxu0 0
    %773 = vmatpush2.bf16.msra.mxu0 0
    %774 = vmatprep.subr.bf16.mxu0 0
    %775 = vmatpush2.bf16.msra.mxu0 0
    %776 = vmatprep.subr.bf16.mxu0 0
    %777 = vmatpush2.bf16.msra.mxu0 0
    %778 = vmatprep.subr.bf16.mxu0 0
    %779 = vmatpush2.bf16.msra.mxu0 0
    %780 = vmatprep.subr.bf16.mxu0 0
    %781 = vmatpush2.bf16.msra.mxu0 0
    %782 = vmatprep.mubr.bf16.mxu0 0
    %783 = vmatmul.mubr.bf16.gmra.mxu0 %v745
    %v784 = vpop.f32.mrf.mxu0
    %v785 = vadd.f32 0.0, %v784
    %v786 = vpop.f32.mrf.mxu0
    %v787 = vpop.f32.mrf.mxu0
    %v788 = vpop.f32.mrf.mxu0
    %789 = vdwg.mxu0
    %791 = vrot.lane.b32.xlu0 %v785, 16
    %v792 = vpop.permute.xlu0 %791
    %v794 = vsel %vm186, %v675, %v792
    %v795 = vpack.c.bf16 %v794, %v569
    %v796 = vlaneseq
    %v797 = vshrl.u32 %v796, 7
    %v798 = vsub.s32 0, %v797
    %v799 = vrot.slane %v72, %v798
    %v804 = vunpack.c.l.b16 %v60
    %v805 = vunpack.c.l.b16 %v61
    %v806 = vunpack.c.l.b16 %v62
    %v807 = vunpack.c.l.b16 %v63
    %v808 = vpack.c.b16 %v805, %v804
    %v809 = vpack.c.b16 %v807, %v806
    %v813 = vsel %vm298, %v795, 0
    %815 = vmatprep.subr.bf16.mxu0 0
    %816 = vmatpush1.bf16.msra.mxu0 0
    %817 = vmatprep.subr.bf16.mxu0 0
    %818 = vmatpush1.bf16.msra.mxu0 0
    %819 = vmatprep.subr.bf16.mxu0 0
    %820 = vmatpush1.bf16.msra.mxu0 0
    %821 = vmatprep.subr.bf16.mxu0 0
    %822 = vmatpush1.bf16.msra.mxu0 0
    %823 = vmatprep.subr.bf16.mxu0 0
    %824 = vmatpush1.bf16.msra.mxu0 0
    %825 = vmatprep.subr.bf16.mxu0 0
    %826 = vmatpush1.bf16.msra.mxu0 0
    %827 = vmatprep.subr.bf16.mxu0 0
    %828 = vmatpush1.bf16.msra.mxu0 %v809
    %829 = vmatprep.subr.bf16.mxu0 0
    %830 = vmatpush1.bf16.msra.mxu0 %v808
    %831 = vmatprep.subr.bf16.mxu0 0
    %832 = vmatpush2.bf16.msra.mxu0 0
    %833 = vmatprep.subr.bf16.mxu0 0
    %834 = vmatpush2.bf16.msra.mxu0 0
    %835 = vmatprep.subr.bf16.mxu0 0
    %836 = vmatpush2.bf16.msra.mxu0 0
    %837 = vmatprep.subr.bf16.mxu0 0
    %838 = vmatpush2.bf16.msra.mxu0 0
    %839 = vmatprep.subr.bf16.mxu0 0
    %840 = vmatpush2.bf16.msra.mxu0 0
    %841 = vmatprep.subr.bf16.mxu0 0
    %842 = vmatpush2.bf16.msra.mxu0 0
    %843 = vmatprep.subr.bf16.mxu0 0
    %844 = vmatpush2.bf16.msra.mxu0 0
    %845 = vmatprep.subr.bf16.mxu0 0
    %846 = vmatpush2.bf16.msra.mxu0 0
    %847 = vmatprep.mubr.bf16.mxu0 0
    %848 = vmatmul.mubr.bf16.gmra.mxu0 %v813
    %v849 = vpop.f32.mrf.mxu0
    %v850 = vadd.f32 %v799, %v849
    %v851 = vpop.f32.mrf.mxu0
    %v852 = vpop.f32.mrf.mxu0
    %v853 = vadd.f32 %v799, %v852
    %v854 = vpop.f32.mrf.mxu0
    %855 = vdwg.mxu0
    %v856 = vadd.f32 %v850, %v275
    %v857 = vadd.f32 %v853, %v278
    %v858 = vsel %vm298, %v856, 0.0
    %859 = vadd.xlane.f32.xlu0 %v858
    %v860 = vpop.xlane.xlu0 %859
    %v861 = vsel %vm298, %v857, 0.0
    %862 = vadd.xlane.f32.xlu0 %v861
    %v863 = vpop.xlane.xlu0 %862
    %v864 = vrcp.pop 32.0
    %v865 = vmul.f32 %v860, %v864
    %v866 = vmul.f32 %v863, %v864
    %v867 = vsub.f32 %v856, %v865
    %v868 = vsub.f32 %v857, %v866
    %v869 = vmul.f32 %v867, %v867
    %v870 = vmul.f32 %v868, %v868
    %v871 = vsel %vm298, %v869, 0.0
    %872 = vadd.xlane.f32.xlu0 %v871
    %v873 = vpop.xlane.xlu0 %872
    %v874 = vsel %vm298, %v870, 0.0
    %875 = vadd.xlane.f32.xlu0 %v874
    %v876 = vpop.xlane.xlu0 %875
    %v877 = vmul.f32 %v873, %v864
    %v878 = vmul.f32 %v876, %v864
    %v879 = vadd.f32 %v877, 1e-12
    %v880 = vadd.f32 %v878, 1e-12
    %v881 = vrsqrt.pop %v879
    %v882 = vrsqrt.pop %v880
    %v883 = vmul.f32 %v867, %v881
    %v884 = vmul.f32 %v868, %v882
    %v885 = vlaneseq
    %v886 = vshrl.u32 %v885, 7
    %v887 = vsub.s32 0, %v886
    %v888 = vrot.slane %v73, %v887
    %v889 = vmul.f32 %v883, %v888
    %v890 = vmul.f32 %v884, %v888
    %v891 = vlaneseq
    %v892 = vshrl.u32 %v891, 7
    %v893 = vsub.s32 0, %v892
    %v894 = vrot.slane %v74, %v893
    %v895 = vadd.f32 %v889, %v894
    %v896 = vadd.f32 %v890, %v894
    %v897 = vpack.c.bf16 %v896, %v895
    %v898 = vlaneseq
    %v899 = vshrl.u32 %v898, 7
    %v900 = vsub.s32 0, %v899
    %v901 = vrot.slane %v75, %v900
    %v906 = vunpack.c.l.b16 %v56
    %v907 = vunpack.c.l.b16 %v57
    %v908 = vunpack.c.l.b16 %v58
    %v909 = vunpack.c.l.b16 %v59
    %v910 = vpack.c.b16 %v907, %v906
    %v911 = vpack.c.b16 %v909, %v908
    %v915 = vsel %vm298, %v897, 0
    %917 = vmatprep.subr.bf16.mxu0 0
    %918 = vmatpush1.bf16.msra.mxu0 0
    %919 = vmatprep.subr.bf16.mxu0 0
    %920 = vmatpush1.bf16.msra.mxu0 0
    %921 = vmatprep.subr.bf16.mxu0 0
    %922 = vmatpush1.bf16.msra.mxu0 0
    %923 = vmatprep.subr.bf16.mxu0 0
    %924 = vmatpush1.bf16.msra.mxu0 0
    %925 = vmatprep.subr.bf16.mxu0 0
    %926 = vmatpush1.bf16.msra.mxu0 0
    %927 = vmatprep.subr.bf16.mxu0 0
    %928 = vmatpush1.bf16.msra.mxu0 0
    %929 = vmatprep.subr.bf16.mxu0 0
    %930 = vmatpush1.bf16.msra.mxu0 %v911
    %931 = vmatprep.subr.bf16.mxu0 0
    %932 = vmatpush1.bf16.msra.mxu0 %v910
    %933 = vmatprep.subr.bf16.mxu0 0
    %934 = vmatpush2.bf16.msra.mxu0 0
    %935 = vmatprep.subr.bf16.mxu0 0
    %936 = vmatpush2.bf16.msra.mxu0 0
    %937 = vmatprep.subr.bf16.mxu0 0
    %938 = vmatpush2.bf16.msra.mxu0 0
    %939 = vmatprep.subr.bf16.mxu0 0
    %940 = vmatpush2.bf16.msra.mxu0 0
    %941 = vmatprep.subr.bf16.mxu0 0
    %942 = vmatpush2.bf16.msra.mxu0 0
    %943 = vmatprep.subr.bf16.mxu0 0
    %944 = vmatpush2.bf16.msra.mxu0 0
    %945 = vmatprep.subr.bf16.mxu0 0
    %946 = vmatpush2.bf16.msra.mxu0 0
    %947 = vmatprep.subr.bf16.mxu0 0
    %948 = vmatpush2.bf16.msra.mxu0 0
    %949 = vmatprep.mubr.bf16.mxu0 0
    %950 = vmatmul.mubr.bf16.gmra.mxu0 %v915
    %v951 = vpop.f32.mrf.mxu0
    %v952 = vadd.f32 %v901, %v951
    %v953 = vpop.f32.mrf.mxu0
    %v954 = vpop.f32.mrf.mxu0
    %v955 = vadd.f32 %v901, %v954
    %v956 = vpop.f32.mrf.mxu0
    %957 = vdwg.mxu0
    %v958 = vmul.f32 %v952, 0.5
    %v959 = vmul.f32 %v955, 0.5
    %v960 = vmul.f32 %v952, 0.044715
    %v961 = vmul.f32 %v955, 0.044715
    %v962 = vmul.f32 %v960, %v952
    %v963 = vmul.f32 %v961, %v955
    %v964 = vmul.f32 %v962, %v952
    %v965 = vmul.f32 %v963, %v955
    %v966 = vadd.f32 %v952, %v964
    %v967 = vadd.f32 %v955, %v965
    %v968 = vmul.f32 %v966, 0.7978846
    %v969 = vmul.f32 %v967, 0.7978846
    %v970 = vtanh.pop %v968
    %v971 = vtanh.pop %v969
    %v972 = vadd.f32 %v970, 1.0
    %v973 = vadd.f32 %v971, 1.0
    %v974 = vmul.f32 %v958, %v972
    %v975 = vmul.f32 %v959, %v973
    %v976 = vpack.c.bf16 %v975, %v974
    %v977 = vlaneseq
    %v978 = vshrl.u32 %v977, 7
    %v979 = vsub.s32 0, %v978
    %v980 = vrot.slane %v76, %v979
    %v989 = vunpack.c.l.b16 %v44
    %v990 = vunpack.c.l.b16 %v45
    %v991 = vunpack.c.l.b16 %v46
    %v992 = vunpack.c.l.b16 %v47
    %v993 = vunpack.c.l.b16 %v48
    %v994 = vunpack.c.l.b16 %v49
    %v995 = vunpack.c.l.b16 %v50
    %v996 = vunpack.c.l.b16 %v51
    %v997 = vpack.c.b16 %v990, %v989
    %v998 = vpack.c.b16 %v992, %v991
    %v999 = vpack.c.b16 %v994, %v993
    %v1000 = vpack.c.b16 %v996, %v995
    %vm1005 = vcmask 523264
    %v1007 = vsel %vm1005, %v976, 0
    %1009 = vmatprep.subr.bf16.mxu0 0
    %1010 = vmatpush1.bf16.msra.mxu0 0
    %1011 = vmatprep.subr.bf16.mxu0 0
    %1012 = vmatpush1.bf16.msra.mxu0 0
    %1013 = vmatprep.subr.bf16.mxu0 0
    %1014 = vmatpush1.bf16.msra.mxu0 0
    %1015 = vmatprep.subr.bf16.mxu0 0
    %1016 = vmatpush1.bf16.msra.mxu0 0
    %1017 = vmatprep.subr.bf16.mxu0 0
    %1018 = vmatpush1.bf16.msra.mxu0 %v1000
    %1019 = vmatprep.subr.bf16.mxu0 0
    %1020 = vmatpush1.bf16.msra.mxu0 %v999
    %1021 = vmatprep.subr.bf16.mxu0 0
    %1022 = vmatpush1.bf16.msra.mxu0 %v998
    %1023 = vmatprep.subr.bf16.mxu0 0
    %1024 = vmatpush1.bf16.msra.mxu0 %v997
    %1025 = vmatprep.subr.bf16.mxu0 0
    %1026 = vmatpush2.bf16.msra.mxu0 0
    %1027 = vmatprep.subr.bf16.mxu0 0
    %1028 = vmatpush2.bf16.msra.mxu0 0
    %1029 = vmatprep.subr.bf16.mxu0 0
    %1030 = vmatpush2.bf16.msra.mxu0 0
    %1031 = vmatprep.subr.bf16.mxu0 0
    %1032 = vmatpush2.bf16.msra.mxu0 0
    %1033 = vmatprep.subr.bf16.mxu0 0
    %1034 = vmatpush2.bf16.msra.mxu0 0
    %1035 = vmatprep.subr.bf16.mxu0 0
    %1036 = vmatpush2.bf16.msra.mxu0 0
    %1037 = vmatprep.subr.bf16.mxu0 0
    %1038 = vmatpush2.bf16.msra.mxu0 0
    %1039 = vmatprep.subr.bf16.mxu0 0
    %1040 = vmatpush2.bf16.msra.mxu0 0
    %1041 = vmatprep.mubr.bf16.mxu0 0
    %1042 = vmatmul.mubr.bf16.gmra.mxu0 %v1007
    %v1043 = vpop.f32.mrf.mxu0
    %v1044 = vadd.f32 %v980, %v1043
    %v1045 = vpop.f32.mrf.mxu0
    %v1046 = vpop.f32.mrf.mxu0
    %v1047 = vadd.f32 %v980, %v1046
    %v1048 = vpop.f32.mrf.mxu0
    %1049 = vdwg.mxu0
    %v1050 = vadd.f32 %v1044, %v895
    %v1051 = vadd.f32 %v1047, %v896
    %v1052 = vsel %vm298, %v1050, 0.0
    %1053 = vadd.xlane.f32.xlu0 %v1052
    %v1054 = vpop.xlane.xlu0 %1053
    %v1055 = vsel %vm298, %v1051, 0.0
    %1056 = vadd.xlane.f32.xlu0 %v1055
    %v1057 = vpop.xlane.xlu0 %1056
    %v1058 = vmul.f32 %v1054, %v864
    %v1059 = vmul.f32 %v1057, %v864
    %v1060 = vsub.f32 %v1050, %v1058
    %v1061 = vsub.f32 %v1051, %v1059
    %v1062 = vmul.f32 %v1060, %v1060
    %v1063 = vmul.f32 %v1061, %v1061
    %v1064 = vsel %vm298, %v1062, 0.0
    %1065 = vadd.xlane.f32.xlu0 %v1064
    %v1066 = vpop.xlane.xlu0 %1065
    %v1067 = vsel %vm298, %v1063, 0.0
    %1068 = vadd.xlane.f32.xlu0 %v1067
    %v1069 = vpop.xlane.xlu0 %1068
    %v1070 = vmul.f32 %v1066, %v864
    %v1071 = vmul.f32 %v1069, %v864
    %v1072 = vadd.f32 %v1070, 1e-12
    %v1073 = vadd.f32 %v1071, 1e-12
    %v1074 = vrsqrt.pop %v1072
    %v1075 = vrsqrt.pop %v1073
    %v1076 = vmul.f32 %v1060, %v1074
    %v1077 = vmul.f32 %v1061, %v1075
    %v1078 = vlaneseq
    %v1079 = vshrl.u32 %v1078, 7
    %v1080 = vsub.s32 0, %v1079
    %v1081 = vrot.slane %v77, %v1080
    %v1082 = vmul.f32 %v1076, %v1081
    %v1083 = vmul.f32 %v1077, %v1081
    %v1084 = vlaneseq
    %v1085 = vshrl.u32 %v1084, 7
    %v1086 = vsub.s32 0, %v1085
    %v1087 = vrot.slane %v78, %v1086
    %v1088 = vadd.f32 %v1082, %v1087
    %v1089 = vadd.f32 %v1083, %v1087
    %v1090 = vpack.c.bf16 %v1089, %v1088
    %v1092 = vsel %vm298, %v1090, 0
    %1094 = vmatprep.subr.bf16.mxu0 0
    %1095 = vmatpush1.bf16.msra.mxu0 0
    %1096 = vmatprep.subr.bf16.mxu0 0
    %1097 = vmatpush1.bf16.msra.mxu0 0
    %1098 = vmatprep.subr.bf16.mxu0 0
    %1099 = vmatpush1.bf16.msra.mxu0 0
    %1100 = vmatprep.subr.bf16.mxu0 0
    %1101 = vmatpush1.bf16.msra.mxu0 0
    %1102 = vmatprep.subr.bf16.mxu0 0
    %1103 = vmatpush1.bf16.msra.mxu0 0
    %1104 = vmatprep.subr.bf16.mxu0 0
    %1105 = vmatpush1.bf16.msra.mxu0 0
    %1106 = vmatprep.subr.bf16.mxu0 0
    %1107 = vmatpush1.bf16.msra.mxu0 %v295
    %1108 = vmatprep.subr.bf16.mxu0 0
    %1109 = vmatpush1.bf16.msra.mxu0 %v294
    %1110 = vmatprep.subr.bf16.mxu0 0
    %1111 = vmatpush2.bf16.msra.mxu0 0
    %1112 = vmatprep.subr.bf16.mxu0 0
    %1113 = vmatpush2.bf16.msra.mxu0 0
    %1114 = vmatprep.subr.bf16.mxu0 0
    %1115 = vmatpush2.bf16.msra.mxu0 0
    %1116 = vmatprep.subr.bf16.mxu0 0
    %1117 = vmatpush2.bf16.msra.mxu0 0
    %1118 = vmatprep.subr.bf16.mxu0 0
    %1119 = vmatpush2.bf16.msra.mxu0 0
    %1120 = vmatprep.subr.bf16.mxu0 0
    %1121 = vmatpush2.bf16.msra.mxu0 0
    %1122 = vmatprep.subr.bf16.mxu0 0
    %1123 = vmatpush2.bf16.msra.mxu0 0
    %1124 = vmatprep.subr.bf16.mxu0 0
    %1125 = vmatpush2.bf16.msra.mxu0 0
    %1126 = vmatprep.mubr.bf16.mxu0 0
    %1127 = vmatmul.mubr.bf16.gmra.mxu0 %v1092
    %v1128 = vpop.f32.mrf.mxu0
    %v1129 = vadd.f32 %v285, %v1128
    %v1130 = vpop.f32.mrf.mxu0
    %v1131 = vpop.f32.mrf.mxu0
    %v1132 = vadd.f32 %v285, %v1131
    %v1133 = vpop.f32.mrf.mxu0
    %1134 = vdwg.mxu0
    %v1135 = vpack.c.bf16 %v1129, %v1129
    %1137 = vrot.lane.b32.xlu0 %v1135, 96
    %v1138 = vpop.permute.xlu0 %1137
    %v1140 = vsel %vm186, %v1135, 0
    %v1143 = vsel %vm186, %v1138, 0
    %1145 = vmatprep.subr.bf16.mxu0 0
    %1146 = vmatpush1.bf16.xpose.msra.mxu0 0
    %1147 = vmatprep.subr.bf16.mxu0 0
    %1148 = vmatpush1.bf16.xpose.msra.mxu0 0
    %1149 = vmatprep.subr.bf16.mxu0 0
    %1150 = vmatpush1.bf16.xpose.msra.mxu0 0
    %1151 = vmatprep.subr.bf16.mxu0 0
    %1152 = vmatpush1.bf16.xpose.msra.mxu0 0
    %1153 = vmatprep.subr.bf16.mxu0 0
    %1154 = vmatpush1.bf16.xpose.msra.mxu0 0
    %1155 = vmatprep.subr.bf16.mxu0 0
    %1156 = vmatpush1.bf16.xpose.msra.mxu0 0
    %1157 = vmatprep.subr.bf16.mxu0 0
    %1158 = vmatpush1.bf16.xpose.msra.mxu0 0
    %1159 = vmatprep.subr.bf16.mxu0 0
    %1160 = vmatpush1.bf16.xpose.msra.mxu0 %v1143
    %1161 = vmatprep.subr.bf16.mxu0 0
    %1162 = vmatpush2.bf16.xpose.msra.mxu0 0
    %1163 = vmatprep.subr.bf16.mxu0 0
    %1164 = vmatpush2.bf16.xpose.msra.mxu0 0
    %1165 = vmatprep.subr.bf16.mxu0 0
    %1166 = vmatpush2.bf16.xpose.msra.mxu0 0
    %1167 = vmatprep.subr.bf16.mxu0 0
    %1168 = vmatpush2.bf16.xpose.msra.mxu0 0
    %1169 = vmatprep.subr.bf16.mxu0 0
    %1170 = vmatpush2.bf16.xpose.msra.mxu0 0
    %1171 = vmatprep.subr.bf16.mxu0 0
    %1172 = vmatpush2.bf16.xpose.msra.mxu0 0
    %1173 = vmatprep.subr.bf16.mxu0 0
    %1174 = vmatpush2.bf16.xpose.msra.mxu0 0
    %1175 = vmatprep.subr.bf16.mxu0 0
    %1176 = vmatpush2.bf16.xpose.msra.mxu0 0
    %1177 = vmatprep.mubr.bf16.mxu0 0
    %1178 = vmatmul.mubr.bf16.gmra.mxu0 %v1140
    %v1179 = vpop.f32.mrf.mxu0
    %v1180 = vadd.f32 0.0, %v1179
    %v1181 = vpop.f32.mrf.mxu0
    %v1182 = vpop.f32.mrf.mxu0
    %v1183 = vpop.f32.mrf.mxu0
    %1184 = vdwg.mxu0
    %v1185 = vsel %vm393, %v1180, -inf
    %1186 = vmax.xlane.f32.xlu0 %v1185
    %v1187 = vpop.xlane.xlu0 %1186
    %v1188 = vsub.f32 %v1180, %v1187
    %v1189 = vmul.f32 %v1188, 1.442695
    %v1190 = vpow.pop %v1189
    %v1191 = vsel %vm393, %v1190, 0.0
    %1192 = vadd.xlane.f32.xlu0 %v1191
    %v1193 = vpop.xlane.xlu0 %1192
    %v1194 = vrcp.pop %v1193
    %v1195 = vmul.f32 %v1190, %v1194
    %v1196 = vpack.c.bf16 %v1195, %v1195
    %1197 = vrot.lane.b32.xlu0 %v1135, 64
    %v1198 = vpop.permute.xlu0 %1197
    %v1200 = vsel %vm393, %v1196, 0
    %v1203 = vsel %vm411, %v1198, 0
    %1205 = vmatprep.subr.bf16.mxu0 0
    %1206 = vmatpush1.bf16.msra.mxu0 0
    %1207 = vmatprep.subr.bf16.mxu0 0
    %1208 = vmatpush1.bf16.msra.mxu0 0
    %1209 = vmatprep.subr.bf16.mxu0 0
    %1210 = vmatpush1.bf16.msra.mxu0 0
    %1211 = vmatprep.subr.bf16.mxu0 0
    %1212 = vmatpush1.bf16.msra.mxu0 0
    %1213 = vmatprep.subr.bf16.mxu0 0
    %1214 = vmatpush1.bf16.msra.mxu0 0
    %1215 = vmatprep.subr.bf16.mxu0 0
    %1216 = vmatpush1.bf16.msra.mxu0 0
    %1217 = vmatprep.subr.bf16.mxu0 0
    %1218 = vmatpush1.bf16.msra.mxu0 0
    %1219 = vmatprep.subr.bf16.mxu0 0
    %1220 = vmatpush1.bf16.msra.mxu0 %v1203
    %1221 = vmatprep.subr.bf16.mxu0 0
    %1222 = vmatpush2.bf16.msra.mxu0 0
    %1223 = vmatprep.subr.bf16.mxu0 0
    %1224 = vmatpush2.bf16.msra.mxu0 0
    %1225 = vmatprep.subr.bf16.mxu0 0
    %1226 = vmatpush2.bf16.msra.mxu0 0
    %1227 = vmatprep.subr.bf16.mxu0 0
    %1228 = vmatpush2.bf16.msra.mxu0 0
    %1229 = vmatprep.subr.bf16.mxu0 0
    %1230 = vmatpush2.bf16.msra.mxu0 0
    %1231 = vmatprep.subr.bf16.mxu0 0
    %1232 = vmatpush2.bf16.msra.mxu0 0
    %1233 = vmatprep.subr.bf16.mxu0 0
    %1234 = vmatpush2.bf16.msra.mxu0 0
    %1235 = vmatprep.subr.bf16.mxu0 0
    %1236 = vmatpush2.bf16.msra.mxu0 0
    %1237 = vmatprep.mubr.bf16.mxu0 0
    %1238 = vmatmul.mubr.bf16.gmra.mxu0 %v1200
    %v1239 = vpop.f32.mrf.mxu0
    %v1240 = vadd.f32 0.0, %v1239
    %v1241 = vpop.f32.mrf.mxu0
    %v1242 = vpop.f32.mrf.mxu0
    %v1243 = vpop.f32.mrf.mxu0
    %1244 = vdwg.mxu0
    %1245 = vrot.lane.b32.xlu0 %v1135, 112
    %v1246 = vpop.permute.xlu0 %1245
    %1247 = vrot.lane.b32.xlu0 %v1135, 80
    %v1248 = vpop.permute.xlu0 %1247
    %v1250 = vsel %vm186, %v1246, 0
    %v1253 = vsel %vm186, %v1248, 0
    %1255 = vmatprep.subr.bf16.mxu0 0
    %1256 = vmatpush1.bf16.xpose.msra.mxu0 0
    %1257 = vmatprep.subr.bf16.mxu0 0
    %1258 = vmatpush1.bf16.xpose.msra.mxu0 0
    %1259 = vmatprep.subr.bf16.mxu0 0
    %1260 = vmatpush1.bf16.xpose.msra.mxu0 0
    %1261 = vmatprep.subr.bf16.mxu0 0
    %1262 = vmatpush1.bf16.xpose.msra.mxu0 0
    %1263 = vmatprep.subr.bf16.mxu0 0
    %1264 = vmatpush1.bf16.xpose.msra.mxu0 0
    %1265 = vmatprep.subr.bf16.mxu0 0
    %1266 = vmatpush1.bf16.xpose.msra.mxu0 0
    %1267 = vmatprep.subr.bf16.mxu0 0
    %1268 = vmatpush1.bf16.xpose.msra.mxu0 0
    %1269 = vmatprep.subr.bf16.mxu0 0
    %1270 = vmatpush1.bf16.xpose.msra.mxu0 %v1253
    %1271 = vmatprep.subr.bf16.mxu0 0
    %1272 = vmatpush2.bf16.xpose.msra.mxu0 0
    %1273 = vmatprep.subr.bf16.mxu0 0
    %1274 = vmatpush2.bf16.xpose.msra.mxu0 0
    %1275 = vmatprep.subr.bf16.mxu0 0
    %1276 = vmatpush2.bf16.xpose.msra.mxu0 0
    %1277 = vmatprep.subr.bf16.mxu0 0
    %1278 = vmatpush2.bf16.xpose.msra.mxu0 0
    %1279 = vmatprep.subr.bf16.mxu0 0
    %1280 = vmatpush2.bf16.xpose.msra.mxu0 0
    %1281 = vmatprep.subr.bf16.mxu0 0
    %1282 = vmatpush2.bf16.xpose.msra.mxu0 0
    %1283 = vmatprep.subr.bf16.mxu0 0
    %1284 = vmatpush2.bf16.xpose.msra.mxu0 0
    %1285 = vmatprep.subr.bf16.mxu0 0
    %1286 = vmatpush2.bf16.xpose.msra.mxu0 0
    %1287 = vmatprep.mubr.bf16.mxu0 0
    %1288 = vmatmul.mubr.bf16.gmra.mxu0 %v1250
    %v1289 = vpop.f32.mrf.mxu0
    %v1290 = vadd.f32 0.0, %v1289
    %v1291 = vpop.f32.mrf.mxu0
    %v1292 = vpop.f32.mrf.mxu0
    %v1293 = vpop.f32.mrf.mxu0
    %1294 = vdwg.mxu0
    %v1295 = vsel %vm393, %v1290, -inf
    %1296 = vmax.xlane.f32.xlu0 %v1295
    %v1297 = vpop.xlane.xlu0 %1296
    %v1298 = vsub.f32 %v1290, %v1297
    %v1299 = vmul.f32 %v1298, 1.442695
    %v1300 = vpow.pop %v1299
    %v1301 = vsel %vm393, %v1300, 0.0
    %1302 = vadd.xlane.f32.xlu0 %v1301
    %v1303 = vpop.xlane.xlu0 %1302
    %v1304 = vrcp.pop %v1303
    %v1305 = vmul.f32 %v1300, %v1304
    %v1306 = vpack.c.bf16 %v1305, %v1305
    %1307 = vrot.lane.b32.xlu0 %v1135, 48
    %v1308 = vpop.permute.xlu0 %1307
    %v1310 = vsel %vm393, %v1306, 0
    %v1313 = vsel %vm411, %v1308, 0
    %1315 = vmatprep.subr.bf16.mxu0 0
    %1316 = vmatpush1.bf16.msra.mxu0 0
    %1317 = vmatprep.subr.bf16.mxu0 0
    %1318 = vmatpush1.bf16.msra.mxu0 0
    %1319 = vmatprep.subr.bf16.mxu0 0
    %1320 = vmatpush1.bf16.msra.mxu0 0
    %1321 = vmatprep.subr.bf16.mxu0 0
    %1322 = vmatpush1.bf16.msra.mxu0 0
    %1323 = vmatprep.subr.bf16.mxu0 0
    %1324 = vmatpush1.bf16.msra.mxu0 0
    %1325 = vmatprep.subr.bf16.mxu0 0
    %1326 = vmatpush1.bf16.msra.mxu0 0
    %1327 = vmatprep.subr.bf16.mxu0 0
    %1328 = vmatpush1.bf16.msra.mxu0 0
    %1329 = vmatprep.subr.bf16.mxu0 0
    %1330 = vmatpush1.bf16.msra.mxu0 %v1313
    %1331 = vmatprep.subr.bf16.mxu0 0
    %1332 = vmatpush2.bf16.msra.mxu0 0
    %1333 = vmatprep.subr.bf16.mxu0 0
    %1334 = vmatpush2.bf16.msra.mxu0 0
    %1335 = vmatprep.subr.bf16.mxu0 0
    %1336 = vmatpush2.bf16.msra.mxu0 0
    %1337 = vmatprep.subr.bf16.mxu0 0
    %1338 = vmatpush2.bf16.msra.mxu0 0
    %1339 = vmatprep.subr.bf16.mxu0 0
    %1340 = vmatpush2.bf16.msra.mxu0 0
    %1341 = vmatprep.subr.bf16.mxu0 0
    %1342 = vmatpush2.bf16.msra.mxu0 0
    %1343 = vmatprep.subr.bf16.mxu0 0
    %1344 = vmatpush2.bf16.msra.mxu0 0
    %1345 = vmatprep.subr.bf16.mxu0 0
    %1346 = vmatpush2.bf16.msra.mxu0 0
    %1347 = vmatprep.mubr.bf16.mxu0 0
    %1348 = vmatmul.mubr.bf16.gmra.mxu0 %v1310
    %v1349 = vpop.f32.mrf.mxu0
    %v1350 = vadd.f32 0.0, %v1349
    %v1351 = vpop.f32.mrf.mxu0
    %v1352 = vpop.f32.mrf.mxu0
    %v1353 = vpop.f32.mrf.mxu0
    %1354 = vdwg.mxu0
    %1356 = vrot.lane.b32.xlu0 %v1350, 16
    %v1357 = vpop.permute.xlu0 %1356
    %v1359 = vsel %vm186, %v1240, %v1357
    %v1360 = vpack.c.bf16 %v1132, %v1132
    %1362 = vrot.lane.b32.xlu0 %v1360, 96
    %v1363 = vpop.permute.xlu0 %1362
    %v1365 = vsel %vm186, %v1360, 0
    %v1368 = vsel %vm186, %v1363, 0
    %1370 = vmatprep.subr.bf16.mxu0 0
    %1371 = vmatpush1.bf16.xpose.msra.mxu0 0
    %1372 = vmatprep.subr.bf16.mxu0 0
    %1373 = vmatpush1.bf16.xpose.msra.mxu0 0
    %1374 = vmatprep.subr.bf16.mxu0 0
    %1375 = vmatpush1.bf16.xpose.msra.mxu0 0
    %1376 = vmatprep.subr.bf16.mxu0 0
    %1377 = vmatpush1.bf16.xpose.msra.mxu0 0
    %1378 = vmatprep.subr.bf16.mxu0 0
    %1379 = vmatpush1.bf16.xpose.msra.mxu0 0
    %1380 = vmatprep.subr.bf16.mxu0 0
    %1381 = vmatpush1.bf16.xpose.msra.mxu0 0
    %1382 = vmatprep.subr.bf16.mxu0 0
    %1383 = vmatpush1.bf16.xpose.msra.mxu0 0
    %1384 = vmatprep.subr.bf16.mxu0 0
    %1385 = vmatpush1.bf16.xpose.msra.mxu0 %v1368
    %1386 = vmatprep.subr.bf16.mxu0 0
    %1387 = vmatpush2.bf16.xpose.msra.mxu0 0
    %1388 = vmatprep.subr.bf16.mxu0 0
    %1389 = vmatpush2.bf16.xpose.msra.mxu0 0
    %1390 = vmatprep.subr.bf16.mxu0 0
    %1391 = vmatpush2.bf16.xpose.msra.mxu0 0
    %1392 = vmatprep.subr.bf16.mxu0 0
    %1393 = vmatpush2.bf16.xpose.msra.mxu0 0
    %1394 = vmatprep.subr.bf16.mxu0 0
    %1395 = vmatpush2.bf16.xpose.msra.mxu0 0
    %1396 = vmatprep.subr.bf16.mxu0 0
    %1397 = vmatpush2.bf16.xpose.msra.mxu0 0
    %1398 = vmatprep.subr.bf16.mxu0 0
    %1399 = vmatpush2.bf16.xpose.msra.mxu0 0
    %1400 = vmatprep.subr.bf16.mxu0 0
    %1401 = vmatpush2.bf16.xpose.msra.mxu0 0
    %1402 = vmatprep.mubr.bf16.mxu0 0
    %1403 = vmatmul.mubr.bf16.gmra.mxu0 %v1365
    %v1404 = vpop.f32.mrf.mxu0
    %v1405 = vadd.f32 0.0, %v1404
    %v1406 = vpop.f32.mrf.mxu0
    %v1407 = vpop.f32.mrf.mxu0
    %v1408 = vpop.f32.mrf.mxu0
    %1409 = vdwg.mxu0
    %v1410 = vsel %vm393, %v1405, -inf
    %1411 = vmax.xlane.f32.xlu0 %v1410
    %v1412 = vpop.xlane.xlu0 %1411
    %v1413 = vsub.f32 %v1405, %v1412
    %v1414 = vmul.f32 %v1413, 1.442695
    %v1415 = vpow.pop %v1414
    %v1416 = vsel %vm393, %v1415, 0.0
    %1417 = vadd.xlane.f32.xlu0 %v1416
    %v1418 = vpop.xlane.xlu0 %1417
    %v1419 = vrcp.pop %v1418
    %v1420 = vmul.f32 %v1415, %v1419
    %v1421 = vpack.c.bf16 %v1420, %v1420
    %1422 = vrot.lane.b32.xlu0 %v1360, 64
    %v1423 = vpop.permute.xlu0 %1422
    %v1425 = vsel %vm393, %v1421, 0
    %v1428 = vsel %vm411, %v1423, 0
    %1430 = vmatprep.subr.bf16.mxu0 0
    %1431 = vmatpush1.bf16.msra.mxu0 0
    %1432 = vmatprep.subr.bf16.mxu0 0
    %1433 = vmatpush1.bf16.msra.mxu0 0
    %1434 = vmatprep.subr.bf16.mxu0 0
    %1435 = vmatpush1.bf16.msra.mxu0 0
    %1436 = vmatprep.subr.bf16.mxu0 0
    %1437 = vmatpush1.bf16.msra.mxu0 0
    %1438 = vmatprep.subr.bf16.mxu0 0
    %1439 = vmatpush1.bf16.msra.mxu0 0
    %1440 = vmatprep.subr.bf16.mxu0 0
    %1441 = vmatpush1.bf16.msra.mxu0 0
    %1442 = vmatprep.subr.bf16.mxu0 0
    %1443 = vmatpush1.bf16.msra.mxu0 0
    %1444 = vmatprep.subr.bf16.mxu0 0
    %1445 = vmatpush1.bf16.msra.mxu0 %v1428
    %1446 = vmatprep.subr.bf16.mxu0 0
    %1447 = vmatpush2.bf16.msra.mxu0 0
    %1448 = vmatprep.subr.bf16.mxu0 0
    %1449 = vmatpush2.bf16.msra.mxu0 0
    %1450 = vmatprep.subr.bf16.mxu0 0
    %1451 = vmatpush2.bf16.msra.mxu0 0
    %1452 = vmatprep.subr.bf16.mxu0 0
    %1453 = vmatpush2.bf16.msra.mxu0 0
    %1454 = vmatprep.subr.bf16.mxu0 0
    %1455 = vmatpush2.bf16.msra.mxu0 0
    %1456 = vmatprep.subr.bf16.mxu0 0
    %1457 = vmatpush2.bf16.msra.mxu0 0
    %1458 = vmatprep.subr.bf16.mxu0 0
    %1459 = vmatpush2.bf16.msra.mxu0 0
    %1460 = vmatprep.subr.bf16.mxu0 0
    %1461 = vmatpush2.bf16.msra.mxu0 0
    %1462 = vmatprep.mubr.bf16.mxu0 0
    %1463 = vmatmul.mubr.bf16.gmra.mxu0 %v1425
    %v1464 = vpop.f32.mrf.mxu0
    %v1465 = vadd.f32 0.0, %v1464
    %v1466 = vpop.f32.mrf.mxu0
    %v1467 = vpop.f32.mrf.mxu0
    %v1468 = vpop.f32.mrf.mxu0
    %1469 = vdwg.mxu0
    %1470 = vrot.lane.b32.xlu0 %v1360, 112
    %v1471 = vpop.permute.xlu0 %1470
    %1472 = vrot.lane.b32.xlu0 %v1360, 80
    %v1473 = vpop.permute.xlu0 %1472
    %v1475 = vsel %vm186, %v1471, 0
    %v1478 = vsel %vm186, %v1473, 0
    %1480 = vmatprep.subr.bf16.mxu0 0
    %1481 = vmatpush1.bf16.xpose.msra.mxu0 0
    %1482 = vmatprep.subr.bf16.mxu0 0
    %1483 = vmatpush1.bf16.xpose.msra.mxu0 0
    %1484 = vmatprep.subr.bf16.mxu0 0
    %1485 = vmatpush1.bf16.xpose.msra.mxu0 0
    %1486 = vmatprep.subr.bf16.mxu0 0
    %1487 = vmatpush1.bf16.xpose.msra.mxu0 0
    %1488 = vmatprep.subr.bf16.mxu0 0
    %1489 = vmatpush1.bf16.xpose.msra.mxu0 0
    %1490 = vmatprep.subr.bf16.mxu0 0
    %1491 = vmatpush1.bf16.xpose.msra.mxu0 0
    %1492 = vmatprep.subr.bf16.mxu0 0
    %1493 = vmatpush1.bf16.xpose.msra.mxu0 0
    %1494 = vmatprep.subr.bf16.mxu0 0
    %1495 = vmatpush1.bf16.xpose.msra.mxu0 %v1478
    %1496 = vmatprep.subr.bf16.mxu0 0
    %1497 = vmatpush2.bf16.xpose.msra.mxu0 0
    %1498 = vmatprep.subr.bf16.mxu0 0
    %1499 = vmatpush2.bf16.xpose.msra.mxu0 0
    %1500 = vmatprep.subr.bf16.mxu0 0
    %1501 = vmatpush2.bf16.xpose.msra.mxu0 0
    %1502 = vmatprep.subr.bf16.mxu0 0
    %1503 = vmatpush2.bf16.xpose.msra.mxu0 0
    %1504 = vmatprep.subr.bf16.mxu0 0
    %1505 = vmatpush2.bf16.xpose.msra.mxu0 0
    %1506 = vmatprep.subr.bf16.mxu0 0
    %1507 = vmatpush2.bf16.xpose.msra.mxu0 0
    %1508 = vmatprep.subr.bf16.mxu0 0
    %1509 = vmatpush2.bf16.xpose.msra.mxu0 0
    %1510 = vmatprep.subr.bf16.mxu0 0
    %1511 = vmatpush2.bf16.xpose.msra.mxu0 0
    %1512 = vmatprep.mubr.bf16.mxu0 0
    %1513 = vmatmul.mubr.bf16.gmra.mxu0 %v1475
    %v1514 = vpop.f32.mrf.mxu0
    %v1515 = vadd.f32 0.0, %v1514
    %v1516 = vpop.f32.mrf.mxu0
    %v1517 = vpop.f32.mrf.mxu0
    %v1518 = vpop.f32.mrf.mxu0
    %1519 = vdwg.mxu0
    %v1520 = vsel %vm393, %v1515, -inf
    %1521 = vmax.xlane.f32.xlu0 %v1520
    %v1522 = vpop.xlane.xlu0 %1521
    %v1523 = vsub.f32 %v1515, %v1522
    %v1524 = vmul.f32 %v1523, 1.442695
    %v1525 = vpow.pop %v1524
    %v1526 = vsel %vm393, %v1525, 0.0
    %1527 = vadd.xlane.f32.xlu0 %v1526
    %v1528 = vpop.xlane.xlu0 %1527
    %v1529 = vrcp.pop %v1528
    %v1530 = vmul.f32 %v1525, %v1529
    %v1531 = vpack.c.bf16 %v1530, %v1530
    %1532 = vrot.lane.b32.xlu0 %v1360, 48
    %v1533 = vpop.permute.xlu0 %1532
    %v1535 = vsel %vm393, %v1531, 0
    %v1538 = vsel %vm411, %v1533, 0
    %1540 = vmatprep.subr.bf16.mxu0 0
    %1541 = vmatpush1.bf16.msra.mxu0 0
    %1542 = vmatprep.subr.bf16.mxu0 0
    %1543 = vmatpush1.bf16.msra.mxu0 0
    %1544 = vmatprep.subr.bf16.mxu0 0
    %1545 = vmatpush1.bf16.msra.mxu0 0
    %1546 = vmatprep.subr.bf16.mxu0 0
    %1547 = vmatpush1.bf16.msra.mxu0 0
    %1548 = vmatprep.subr.bf16.mxu0 0
    %1549 = vmatpush1.bf16.msra.mxu0 0
    %1550 = vmatprep.subr.bf16.mxu0 0
    %1551 = vmatpush1.bf16.msra.mxu0 0
    %1552 = vmatprep.subr.bf16.mxu0 0
    %1553 = vmatpush1.bf16.msra.mxu0 0
    %1554 = vmatprep.subr.bf16.mxu0 0
    %1555 = vmatpush1.bf16.msra.mxu0 %v1538
    %1556 = vmatprep.subr.bf16.mxu0 0
    %1557 = vmatpush2.bf16.msra.mxu0 0
    %1558 = vmatprep.subr.bf16.mxu0 0
    %1559 = vmatpush2.bf16.msra.mxu0 0
    %1560 = vmatprep.subr.bf16.mxu0 0
    %1561 = vmatpush2.bf16.msra.mxu0 0
    %1562 = vmatprep.subr.bf16.mxu0 0
    %1563 = vmatpush2.bf16.msra.mxu0 0
    %1564 = vmatprep.subr.bf16.mxu0 0
    %1565 = vmatpush2.bf16.msra.mxu0 0
    %1566 = vmatprep.subr.bf16.mxu0 0
    %1567 = vmatpush2.bf16.msra.mxu0 0
    %1568 = vmatprep.subr.bf16.mxu0 0
    %1569 = vmatpush2.bf16.msra.mxu0 0
    %1570 = vmatprep.subr.bf16.mxu0 0
    %1571 = vmatpush2.bf16.msra.mxu0 0
    %1572 = vmatprep.mubr.bf16.mxu0 0
    %1573 = vmatmul.mubr.bf16.gmra.mxu0 %v1535
    %v1574 = vpop.f32.mrf.mxu0
    %v1575 = vadd.f32 0.0, %v1574
    %v1576 = vpop.f32.mrf.mxu0
    %v1577 = vpop.f32.mrf.mxu0
    %v1578 = vpop.f32.mrf.mxu0
    %1579 = vdwg.mxu0
    %1581 = vrot.lane.b32.xlu0 %v1575, 16
    %v1582 = vpop.permute.xlu0 %1581
    %v1584 = vsel %vm186, %v1465, %v1582
    %v1585 = vpack.c.bf16 %v1584, %v1359
    %v1587 = vsel %vm298, %v1585, 0
    %1589 = vmatprep.subr.bf16.mxu0 0
    %1590 = vmatpush1.bf16.msra.mxu0 0
    %1591 = vmatprep.subr.bf16.mxu0 0
    %1592 = vmatpush1.bf16.msra.mxu0 0
    %1593 = vmatprep.subr.bf16.mxu0 0
    %1594 = vmatpush1.bf16.msra.mxu0 0
    %1595 = vmatprep.subr.bf16.mxu0 0
    %1596 = vmatpush1.bf16.msra.mxu0 0
    %1597 = vmatprep.subr.bf16.mxu0 0
    %1598 = vmatpush1.bf16.msra.mxu0 0
    %1599 = vmatprep.subr.bf16.mxu0 0
    %1600 = vmatpush1.bf16.msra.mxu0 0
    %1601 = vmatprep.subr.bf16.mxu0 0
    %1602 = vmatpush1.bf16.msra.mxu0 %v809
    %1603 = vmatprep.subr.bf16.mxu0 0
    %1604 = vmatpush1.bf16.msra.mxu0 %v808
    %1605 = vmatprep.subr.bf16.mxu0 0
    %1606 = vmatpush2.bf16.msra.mxu0 0
    %1607 = vmatprep.subr.bf16.mxu0 0
    %1608 = vmatpush2.bf16.msra.mxu0 0
    %1609 = vmatprep.subr.bf16.mxu0 0
    %1610 = vmatpush2.bf16.msra.mxu0 0
    %1611 = vmatprep.subr.bf16.mxu0 0
    %1612 = vmatpush2.bf16.msra.mxu0 0
    %1613 = vmatprep.subr.bf16.mxu0 0
    %1614 = vmatpush2.bf16.msra.mxu0 0
    %1615 = vmatprep.subr.bf16.mxu0 0
    %1616 = vmatpush2.bf16.msra.mxu0 0
    %1617 = vmatprep.subr.bf16.mxu0 0
    %1618 = vmatpush2.bf16.msra.mxu0 0
    %1619 = vmatprep.subr.bf16.mxu0 0
    %1620 = vmatpush2.bf16.msra.mxu0 0
    %1621 = vmatprep.mubr.bf16.mxu0 0
    %1622 = vmatmul.mubr.bf16.gmra.mxu0 %v1587
    %v1623 = vpop.f32.mrf.mxu0
    %v1624 = vadd.f32 %v799, %v1623
    %v1625 = vpop.f32.mrf.mxu0
    %v1626 = vpop.f32.mrf.mxu0
    %v1627 = vadd.f32 %v799, %v1626
    %v1628 = vpop.f32.mrf.mxu0
    %1629 = vdwg.mxu0
    %v1630 = vadd.f32 %v1624, %v1088
    %v1631 = vadd.f32 %v1627, %v1089
    %v1632 = vsel %vm298, %v1630, 0.0
    %1633 = vadd.xlane.f32.xlu0 %v1632
    %v1634 = vpop.xlane.xlu0 %1633
    %v1635 = vsel %vm298, %v1631, 0.0
    %1636 = vadd.xlane.f32.xlu0 %v1635
    %v1637 = vpop.xlane.xlu0 %1636
    %v1638 = vmul.f32 %v1634, %v864
    %v1639 = vmul.f32 %v1637, %v864
    %v1640 = vsub.f32 %v1630, %v1638
    %v1641 = vsub.f32 %v1631, %v1639
    %v1642 = vmul.f32 %v1640, %v1640
    %v1643 = vmul.f32 %v1641, %v1641
    %v1644 = vsel %vm298, %v1642, 0.0
    %1645 = vadd.xlane.f32.xlu0 %v1644
    %v1646 = vpop.xlane.xlu0 %1645
    %v1647 = vsel %vm298, %v1643, 0.0
    %1648 = vadd.xlane.f32.xlu0 %v1647
    %v1649 = vpop.xlane.xlu0 %1648
    %v1650 = vmul.f32 %v1646, %v864
    %v1651 = vmul.f32 %v1649, %v864
    %v1652 = vadd.f32 %v1650, 1e-12
    %v1653 = vadd.f32 %v1651, 1e-12
    %v1654 = vrsqrt.pop %v1652
    %v1655 = vrsqrt.pop %v1653
    %v1656 = vmul.f32 %v1640, %v1654
    %v1657 = vmul.f32 %v1641, %v1655
    %v1658 = vmul.f32 %v1656, %v888
    %v1659 = vmul.f32 %v1657, %v888
    %v1660 = vadd.f32 %v1658, %v894
    %v1661 = vadd.f32 %v1659, %v894
    %v1662 = vpack.c.bf16 %v1661, %v1660
    %v1664 = vsel %vm298, %v1662, 0
    %1666 = vmatprep.subr.bf16.mxu0 0
    %1667 = vmatpush1.bf16.msra.mxu0 0
    %1668 = vmatprep.subr.bf16.mxu0 0
    %1669 = vmatpush1.bf16.msra.mxu0 0
    %1670 = vmatprep.subr.bf16.mxu0 0
    %1671 = vmatpush1.bf16.msra.mxu0 0
    %1672 = vmatprep.subr.bf16.mxu0 0
    %1673 = vmatpush1.bf16.msra.mxu0 0
    %1674 = vmatprep.subr.bf16.mxu0 0
    %1675 = vmatpush1.bf16.msra.mxu0 0
    %1676 = vmatprep.subr.bf16.mxu0 0
    %1677 = vmatpush1.bf16.msra.mxu0 0
    %1678 = vmatprep.subr.bf16.mxu0 0
    %1679 = vmatpush1.bf16.msra.mxu0 %v911
    %1680 = vmatprep.subr.bf16.mxu0 0
    %1681 = vmatpush1.bf16.msra.mxu0 %v910
    %1682 = vmatprep.subr.bf16.mxu0 0
    %1683 = vmatpush2.bf16.msra.mxu0 0
    %1684 = vmatprep.subr.bf16.mxu0 0
    %1685 = vmatpush2.bf16.msra.mxu0 0
    %1686 = vmatprep.subr.bf16.mxu0 0
    %1687 = vmatpush2.bf16.msra.mxu0 0
    %1688 = vmatprep.subr.bf16.mxu0 0
    %1689 = vmatpush2.bf16.msra.mxu0 0
    %1690 = vmatprep.subr.bf16.mxu0 0
    %1691 = vmatpush2.bf16.msra.mxu0 0
    %1692 = vmatprep.subr.bf16.mxu0 0
    %1693 = vmatpush2.bf16.msra.mxu0 0
    %1694 = vmatprep.subr.bf16.mxu0 0
    %1695 = vmatpush2.bf16.msra.mxu0 0
    %1696 = vmatprep.subr.bf16.mxu0 0
    %1697 = vmatpush2.bf16.msra.mxu0 0
    %1698 = vmatprep.mubr.bf16.mxu0 0
    %1699 = vmatmul.mubr.bf16.gmra.mxu0 %v1664
    %v1700 = vpop.f32.mrf.mxu0
    %v1701 = vadd.f32 %v901, %v1700
    %v1702 = vpop.f32.mrf.mxu0
    %v1703 = vpop.f32.mrf.mxu0
    %v1704 = vadd.f32 %v901, %v1703
    %v1705 = vpop.f32.mrf.mxu0
    %1706 = vdwg.mxu0
    %v1707 = vmul.f32 %v1701, 0.5
    %v1708 = vmul.f32 %v1704, 0.5
    %v1709 = vmul.f32 %v1701, 0.044715
    %v1710 = vmul.f32 %v1704, 0.044715
    %v1711 = vmul.f32 %v1709, %v1701
    %v1712 = vmul.f32 %v1710, %v1704
    %v1713 = vmul.f32 %v1711, %v1701
    %v1714 = vmul.f32 %v1712, %v1704
    %v1715 = vadd.f32 %v1701, %v1713
    %v1716 = vadd.f32 %v1704, %v1714
    %v1717 = vmul.f32 %v1715, 0.7978846
    %v1718 = vmul.f32 %v1716, 0.7978846
    %v1719 = vtanh.pop %v1717
    %v1720 = vtanh.pop %v1718
    %v1721 = vadd.f32 %v1719, 1.0
    %v1722 = vadd.f32 %v1720, 1.0
    %v1723 = vmul.f32 %v1707, %v1721
    %v1724 = vmul.f32 %v1708, %v1722
    %v1725 = vpack.c.bf16 %v1724, %v1723
    %v1727 = vsel %vm1005, %v1725, 0
    %1729 = vmatprep.subr.bf16.mxu0 0
    %1730 = vmatpush1.bf16.msra.mxu0 0
    %1731 = vmatprep.subr.bf16.mxu0 0
    %1732 = vmatpush1.bf16.msra.mxu0 0
    %1733 = vmatprep.subr.bf16.mxu0 0
    %1734 = vmatpush1.bf16.msra.mxu0 0
    %1735 = vmatprep.subr.bf16.mxu0 0
    %1736 = vmatpush1.bf16.msra.mxu0 0
    %1737 = vmatprep.subr.bf16.mxu0 0
    %1738 = vmatpush1.bf16.msra.mxu0 %v1000
    %1739 = vmatprep.subr.bf16.mxu0 0
    %1740 = vmatpush1.bf16.msra.mxu0 %v999
    %1741 = vmatprep.subr.bf16.mxu0 0
    %1742 = vmatpush1.bf16.msra.mxu0 %v998
    %1743 = vmatprep.subr.bf16.mxu0 0
    %1744 = vmatpush1.bf16.msra.mxu0 %v997
    %1745 = vmatprep.subr.bf16.mxu0 0
    %1746 = vmatpush2.bf16.msra.mxu0 0
    %1747 = vmatprep.subr.bf16.mxu0 0
    %1748 = vmatpush2.bf16.msra.mxu0 0
    %1749 = vmatprep.subr.bf16.mxu0 0
    %1750 = vmatpush2.bf16.msra.mxu0 0
    %1751 = vmatprep.subr.bf16.mxu0 0
    %1752 = vmatpush2.bf16.msra.mxu0 0
    %1753 = vmatprep.subr.bf16.mxu0 0
    %1754 = vmatpush2.bf16.msra.mxu0 0
    %1755 = vmatprep.subr.bf16.mxu0 0
    %1756 = vmatpush2.bf16.msra.mxu0 0
    %1757 = vmatprep.subr.bf16.mxu0 0
    %1758 = vmatpush2.bf16.msra.mxu0 0
    %1759 = vmatprep.subr.bf16.mxu0 0
    %1760 = vmatpush2.bf16.msra.mxu0 0
    %1761 = vmatprep.mubr.bf16.mxu0 0
    %1762 = vmatmul.mubr.bf16.gmra.mxu0 %v1727
    %v1763 = vpop.f32.mrf.mxu0
    %v1764 = vadd.f32 %v980, %v1763
    %v1765 = vpop.f32.mrf.mxu0
    %v1766 = vpop.f32.mrf.mxu0
    %v1767 = vadd.f32 %v980, %v1766
    %v1768 = vpop.f32.mrf.mxu0
    %1769 = vdwg.mxu0
    %v1770 = vadd.f32 %v1764, %v1660
    %v1771 = vadd.f32 %v1767, %v1661
    %v1772 = vsel %vm298, %v1770, 0.0
    %1773 = vadd.xlane.f32.xlu0 %v1772
    %v1774 = vpop.xlane.xlu0 %1773
    %v1775 = vsel %vm298, %v1771, 0.0
    %1776 = vadd.xlane.f32.xlu0 %v1775
    %v1777 = vpop.xlane.xlu0 %1776
    %v1778 = vmul.f32 %v1774, %v864
    %v1779 = vmul.f32 %v1777, %v864
    %v1780 = vsub.f32 %v1770, %v1778
    %v1781 = vsub.f32 %v1771, %v1779
    %v1782 = vmul.f32 %v1780, %v1780
    %v1783 = vmul.f32 %v1781, %v1781
    %v1784 = vsel %vm298, %v1782, 0.0
    %1785 = vadd.xlane.f32.xlu0 %v1784
    %v1786 = vpop.xlane.xlu0 %1785
    %v1787 = vsel %vm298, %v1783, 0.0
    %1788 = vadd.xlane.f32.xlu0 %v1787
    %v1789 = vpop.xlane.xlu0 %1788
    %v1790 = vmul.f32 %v1786, %v864
    %v1791 = vmul.f32 %v1789, %v864
    %v1792 = vadd.f32 %v1790, 1e-12
    %v1793 = vadd.f32 %v1791, 1e-12
    %v1794 = vrsqrt.pop %v1792
    %v1795 = vrsqrt.pop %v1793
    %v1796 = vmul.f32 %v1780, %v1794
    %v1797 = vmul.f32 %v1781, %v1795
    %v1798 = vmul.f32 %v1796, %v1081
    %v1799 = vmul.f32 %v1797, %v1081
    %v1800 = vadd.f32 %v1798, %v1087
    %v1801 = vadd.f32 %v1799, %v1087
    %v1802 = vpack.c.bf16 %v1801, %v1800
    %v1803 = vlaneseq
    %v1804 = vshrl.u32 %v1803, 7
    %v1805 = vsub.s32 0, %v1804
    %v1806 = vrot.slane %v79, %v1805
    %v1811 = vunpack.c.l.b16 %v64
    %v1812 = vunpack.c.l.b16 %v65
    %v1813 = vunpack.c.l.b16 %v66
    %v1814 = vunpack.c.l.b16 %v67
    %v1815 = vpack.c.b16 %v1812, %v1811
    %v1816 = vpack.c.b16 %v1814, %v1813
    %v1820 = vsel %vm298, %v1802, 0
    %1822 = vmatprep.subr.bf16.mxu0 0
    %1823 = vmatpush1.bf16.msra.mxu0 0
    %1824 = vmatprep.subr.bf16.mxu0 0
    %1825 = vmatpush1.bf16.msra.mxu0 0
    %1826 = vmatprep.subr.bf16.mxu0 0
    %1827 = vmatpush1.bf16.msra.mxu0 0
    %1828 = vmatprep.subr.bf16.mxu0 0
    %1829 = vmatpush1.bf16.msra.mxu0 0
    %1830 = vmatprep.subr.bf16.mxu0 0
    %1831 = vmatpush1.bf16.msra.mxu0 0
    %1832 = vmatprep.subr.bf16.mxu0 0
    %1833 = vmatpush1.bf16.msra.mxu0 0
    %1834 = vmatprep.subr.bf16.mxu0 0
    %1835 = vmatpush1.bf16.msra.mxu0 %v1816
    %1836 = vmatprep.subr.bf16.mxu0 0
    %1837 = vmatpush1.bf16.msra.mxu0 %v1815
    %1838 = vmatprep.subr.bf16.mxu0 0
    %1839 = vmatpush2.bf16.msra.mxu0 0
    %1840 = vmatprep.subr.bf16.mxu0 0
    %1841 = vmatpush2.bf16.msra.mxu0 0
    %1842 = vmatprep.subr.bf16.mxu0 0
    %1843 = vmatpush2.bf16.msra.mxu0 0
    %1844 = vmatprep.subr.bf16.mxu0 0
    %1845 = vmatpush2.bf16.msra.mxu0 0
    %1846 = vmatprep.subr.bf16.mxu0 0
    %1847 = vmatpush2.bf16.msra.mxu0 0
    %1848 = vmatprep.subr.bf16.mxu0 0
    %1849 = vmatpush2.bf16.msra.mxu0 0
    %1850 = vmatprep.subr.bf16.mxu0 0
    %1851 = vmatpush2.bf16.msra.mxu0 0
    %1852 = vmatprep.subr.bf16.mxu0 0
    %1853 = vmatpush2.bf16.msra.mxu0 0
    %1854 = vmatprep.mubr.bf16.mxu0 0
    %1855 = vmatmul.mubr.bf16.gmra.mxu0 %v1820
    %v1856 = vpop.f32.mrf.mxu0
    %v1857 = vadd.f32 %v1806, %v1856
    %v1858 = vpop.f32.mrf.mxu0
    %v1859 = vpop.f32.mrf.mxu0
    %v1860 = vadd.f32 %v1806, %v1859
    %v1861 = vpop.f32.mrf.mxu0
    %1862 = vdwg.mxu0
    %vm1863 = vcmask 15360
    %1864 = vst.msk [vmem:[%s5] sm:$0xff] %vm1863, %v1857
    %1865 = vst.msk [vmem:[%s5 + $0x8] sm:$0xff] %vm1863, %v1860
    %v1866 = vld [vmem:[%s0] sm:$0xff]
    %v1867 = vld [vmem:[%s0 + $0x8] sm:$0xff]
    %1868 = vset.pattern.permute.xlu0 1
    %1869 = vperm.xlu0 %1868, %v1866
    %v1870 = vpop.permute.xlu0 %1869
    %1871 = vset.pattern.permute.xlu0 1
    %1872 = vperm.xlu0 %1871, %v1867
    %v1873 = vpop.permute.xlu0 %1872
    %vm1874 = vcmp.eq.s32.totalorder %v83, %v1870
    %vm1875 = vcmp.eq.s32.totalorder %v83, %v1873
    %v1876 = vsel %vm1874, %v1857, 0.0
    %v1877 = vsel %vm1875, %v1860, 0.0
    %v1878 = vsel %vm1863, %v1876, 0.0
    %1879 = vadd.xlane.f32.xlu0 %v1878
    %v1880 = vpop.xlane.xlu0 %1879
    %v1881 = vsel %vm1863, %v1877, 0.0
    %1882 = vadd.xlane.f32.xlu0 %v1881
    %v1883 = vpop.xlane.xlu0 %1882
    %v1884 = vsel %vm1863, %v1857, -inf
    %1885 = vmax.xlane.f32.xlu0 %v1884
    %v1886 = vpop.xlane.xlu0 %1885
    %v1887 = vsel %vm1863, %v1860, -inf
    %1888 = vmax.xlane.f32.xlu0 %v1887
    %v1889 = vpop.xlane.xlu0 %1888
    %v1890 = vsub.f32 %v1857, %v1886
    %v1891 = vsub.f32 %v1860, %v1889
    %v1892 = vmul.f32 %v1890, 1.442695
    %v1893 = vpow.pop %v1892
    %v1894 = vmul.f32 %v1891, 1.442695
    %v1895 = vpow.pop %v1894
    %v1896 = vsel %vm1863, %v1893, 0.0
    %1897 = vadd.xlane.f32.xlu0 %v1896
    %v1898 = vpop.xlane.xlu0 %1897
    %v1899 = vsel %vm1863, %v1895, 0.0
    %1900 = vadd.xlane.f32.xlu0 %v1899
    %v1901 = vpop.xlane.xlu0 %1900
    %v1902 = vlog2.pop %v1898
    %v1903 = vmul.f32 %v1902, 0.6931472
    %v1904 = vlog2.pop %v1901
    %v1905 = vmul.f32 %v1904, 0.6931472
    %v1906 = vadd.f32 %v1903, %v1886
    %v1907 = vadd.f32 %v1905, %v1889
    %v1908 = vsub.f32 %v1906, %v1880
    %v1909 = vsub.f32 %v1907, %v1883
    %vm1910 = vcmask 7168
    %v1911 = vsel %vm1910, %v1908, 0.0
    %v1912 = vsel %vm1910, %v1909, 0.0
    %v1913 = vadd.f32 %v1911, %v1912
    %1914 = vadd.xlane.f32.xlu0 %v1913
    %v1915 = vpop.xlane.xlu0 %1914
    %v1916 = vrot.slane %v1915, 4
    %v1917 = vadd.f32 %v1915, %v1916
    %v1918 = vrot.slane %v1917, 2
    %v1919 = vadd.f32 %v1917, %v1918
    %v1920 = vrot.slane %v1919, 1
    %v1921 = vadd.f32 %v1919, %v1920
    %s1922 = vtos %v1921
    %v1923 = vrcp.pop 16.0
    %s1924 = vtos %v1923
    %s1925 = smul.f32 %s1922, %s1924
    %v1926 = vstv %s1925
    %vm1927 = vcmask 0
    %1928 = vst.msk [vmem:[#allocation2] sm:$0x1] %vm1927, %v1926
    // Predicated region
    $region22: #{tpu_custom_call.1} parent=1 // pred_check
      _
    $region23: #{tpu_custom_call.1} parent=1 // pred_check_branch
      %1930 = sbr.rel (0) target = $region25
    $region24: #{tpu_custom_call.1} parent=1 // pred_region
      _
    $region25: #{tpu_custom_call.1} parent=1 // pred_fallthru
      _
    // Predicated region
    $region26: #{tpu_custom_call.1} parent=1 // pred_check
      _
    $region27: #{tpu_custom_call.1} parent=1 // pred_check_branch
      %1932 = sbr.rel (0) target = $region29
    $region28: #{tpu_custom_call.1} parent=1 // pred_region
      %s1934 = ssub.s32 16, 16
      %1935 = vsyncadd [#allocation3], %s1934
      %s1937 = sshll.u32 [#allocation2], 4
      %s1938 = int_to_ptr.vmem [resolvable:$true] %s1937
      %1940 = dma.vmem_to_hbm [thread:$0]  %s1938, 16, %s6, [#allocation3]
    $region29: #{tpu_custom_call.1} parent=1 // pred_fallthru
      _
    // Predicated region
    $region30: #{tpu_custom_call.1} parent=1 // pred_check
      _
    $region31: #{tpu_custom_call.1} parent=1 // pred_check_branch
      %1942 = sbr.rel (0) target = $region33
    $region32: #{tpu_custom_call.1} parent=1 // pred_region
      _
    $region33: #{tpu_custom_call.1} parent=1 // pred_fallthru
      _
    // Predicated region
    $region34: #{tpu_custom_call.1} parent=1 // pred_check
      _
    $region35: #{tpu_custom_call.1} parent=1 // pred_check_branch
      %1944 = sbr.rel (0) target = $region37
    $region36: #{tpu_custom_call.1} parent=1 // pred_region
      %1945 = dma.done [#allocation3], 16
    $region37: #{tpu_custom_call.1} parent=1 // pred_fallthru
      _
    %1946 = vsyncpa [#allocation3], 1

</llo_original>
